<compile_context>
chip_gen: v6e
topology: v6e:2x2x1
jax: 0.10.0
libtpu: 0.0.40
codegen_flags: <defaults>
</compile_context>

<pallas_src>
import functools

import numpy as np
import jax
import jax.numpy as jnp
from jax.experimental import pallas as pl
from jax.experimental.pallas import tpu as pltpu


# --------------------------------------------------------------------------
# kernel
# --------------------------------------------------------------------------
def _build_kernel(H, W, Cm, n, n2, has_low):
    f32 = jnp.float32
    HW = H * W
    G = 2 * W + 2                    # guard band sized for the dil=2 branch
    Lpad = HW + 2 * G
    K = 9 * Cm + 1                   # im2col depth + ones row (bias fold)

    def kernel(*refs):
        if has_low:
            (high_ref, low_ref, w0T_ref, wlowT_ref, wblk1T_ref, wblk3T_ref,
             a1_ref, a2_ref, mask_ref, out_ref, pad_ref, t_ref) = refs
        else:
            (high_ref, w0T_ref, wblk1T_ref, wblk3T_ref,
             a1_ref, a2_ref, mask_ref, out_ref, pad_ref, t_ref) = refs

        # ---- conv0 (1x1): (Cm,Ch) @ (Ch,HW) -> (Cm,HW), lane-dense ---------
        in0 = jnp.dot(w0T_ref[...], high_ref[0], preferred_element_type=f32)

        # ---- stage conv0 output into the flat row-padded scratch -----------
        # pad_ref[:, G+i] == in0[:, i]; guard bands provide the top/bottom
        # zero rows of both 3x3 convs; left/right padding is a lane mask.
        pad_ref[:, 0:G] = jnp.zeros((Cm, G), f32)
        pad_ref[:, G + HW:Lpad] = jnp.zeros((Cm, G), f32)
        pad_ref[:, G:G + HW] = in0

        # ones row -> folded BN bias (last column of wblk1T / wblk3T)
        t_ref[9 * Cm:9 * Cm + 1, :] = jnp.ones((1, HW), f32)

        # ---- transposed im2col: each tap is a dense (chan x HW) row block --
        tt = 0
        for ky in range(3):
            for kx in range(3):
                s1 = G + (ky - 1) * W + (kx - 1)            # dil=1 / pad=1
                tap1 = pad_ref[0:n, s1:s1 + HW]
                if kx == 0:
                    tap1 = tap1 * mask_ref[0:1, :]
                elif kx == 2:
                    tap1 = tap1 * mask_ref[1:2, :]
                t_ref[tt * n:(tt + 1) * n, :] = tap1
                if n2 > 0:
                    s2 = G + 2 * ((ky - 1) * W + (kx - 1))  # dil=2 / pad=2
                    tap2 = pad_ref[n:Cm, s2:s2 + HW]
                    if kx == 0:
                        tap2 = tap2 * mask_ref[2:3, :]
                    elif kx == 2:
                        tap2 = tap2 * mask_ref[3:4, :]
                    t_ref[9 * n + tt * n2:9 * n + (tt + 1) * n2, :] = tap2
                tt += 1

        # Single big-K matmul; wblk1T is block-diagonal [conv1 | conv2] with
        # BN1 scale folded into its rows and BN1(+BN2) bias in the ones column.
        high = jnp.dot(wblk1T_ref[...], t_ref[...], preferred_element_type=f32)

        if has_low:
            high = high + jnp.dot(wlowT_ref[...], low_ref[0],
                                  preferred_element_type=f32)

        # PReLU(middle_channel): per-channel alpha, lane-broadcast
        act = jnp.where(high > 0, high, a1_ref[...] * high)

        # ---- refine: 3x3 pad=1 conv, reusing the pad / t scratches ---------
        pad_ref[:, G:G + HW] = act              # guard bands are still zero
        tt = 0
        for ky in range(3):
            for kx in range(3):
                s = G + (ky - 1) * W + (kx - 1)
                tap = pad_ref[:, s:s + HW]
                if kx == 0:
                    tap = tap * mask_ref[0:1, :]
                elif kx == 2:
                    tap = tap * mask_ref[1:2, :]
                t_ref[tt * Cm:(tt + 1) * Cm, :] = tap
                tt += 1
        y = jnp.dot(wblk3T_ref[...], t_ref[...], preferred_element_type=f32)
        y = jnp.where(y > 0, y, a2_ref[...] * y)   # PReLU(), single alpha

        out_ref[0] = y.astype(out_ref.dtype)

    return kernel


# --------------------------------------------------------------------------
# pallas_call builder (cached per static configuration)
# --------------------------------------------------------------------------
@functools.lru_cache(maxsize=None)
def _get_pallas_fn(B, H, W, Ch, Cl, Cm, in_dtype, out_dtype, has_low):
    n = -(-Cm // 2)
    n2 = Cm - n
    HW = H * W
    G = 2 * W + 2
    Lpad = HW + 2 * G
    K = 9 * Cm + 1
    kernel = _build_kernel(H, W, Cm, n, n2, has_low)

    def batch_map(b):
        return (b, 0, 0)

    def const_map(b):
        return (0, 0)

    in_specs = [pl.BlockSpec((1, Ch, HW), batch_map)]            # high
    if has_low:
        in_specs.append(pl.BlockSpec((1, Cl, HW), batch_map))    # low
    in_specs.append(pl.BlockSpec((Cm, Ch), const_map))           # w0^T
    if has_low:
        in_specs.append(pl.BlockSpec((Cm, Cl), const_map))       # wlow^T (BN2 scale folded)
    in_specs.append(pl.BlockSpec((Cm, K), const_map))            # block-diag conv1|conv2 (+bias col)
    in_specs.append(pl.BlockSpec((Cm, K), const_map))            # refine weight (+bias col)
    in_specs.append(pl.BlockSpec((Cm, 1), const_map))            # PReLU(Cm) alpha
    in_specs.append(pl.BlockSpec((1, 1), const_map))             # PReLU() alpha
    in_specs.append(pl.BlockSpec((4, HW), const_map))            # left/right edge masks

    grid_spec = pltpu.PrefetchScalarGridSpec(
        num_scalar_prefetch=0,
        grid=(B,),
        in_specs=in_specs,
        out_specs=pl.BlockSpec((1, Cm, HW), batch_map),
        scratch_shapes=[
            pltpu.VMEM((Cm, Lpad), jnp.float32),   # flat row-padded conv input
            pltpu.VMEM((K, HW), jnp.float32),      # transposed im2col + ones row
        ],
    )

    return jax.jit(pl.pallas_call(
        kernel,
        out_shape=jax.ShapeDtypeStruct((B, Cm, HW), out_dtype),
        grid_spec=grid_spec,
        compiler_params=pltpu.CompilerParams(
            dimension_semantics=("parallel",),
            vmem_limit_bytes=32 * 1024 * 1024),
    ))


# --------------------------------------------------------------------------
# parameter preparation (one-time BN folding / transposes / dtype casts)
# --------------------------------------------------------------------------
def prepare_params(params, in_dtype=jnp.bfloat16):
    f32 = jnp.float32
    Cm = params["w0"].shape[-1]
    n = -(-Cm // 2)
    n2 = Cm - n
    K = 9 * Cm + 1

    bn1s = params["bn1s"].reshape(Cm); bn1b = params["bn1b"].reshape(Cm)
    bn2s = params["bn2s"].reshape(Cm); bn2b = params["bn2b"].reshape(Cm)
    bn3s = params["bn3s"].reshape(Cm); bn3b = params["bn3b"].reshape(Cm)
    w1, w2, wref = params["w1"], params["w2"], params["wref"]

    # Transposed block-diagonal im2col weights: cols = 9 taps x channels,
    # rows = Cm outputs; BN scale folded into rows, BN bias into last column.
    wblk1 = jnp.zeros((Cm, K), f32)
    wblk3 = jnp.zeros((Cm, K), f32)
    tt = 0
    for ky in range(3):
        for kx in range(3):
            wblk1 = wblk1.at[0:n, tt * n:(tt + 1) * n].set(w1[ky, kx].T)
            if n2 > 0:
                wblk1 = wblk1.at[n:Cm, 9 * n + tt * n2:9 * n + (tt + 1) * n2
                                 ].set(w2[ky, kx].T)
            wblk3 = wblk3.at[:, tt * Cm:(tt + 1) * Cm].set(wref[ky, kx].T)
            tt += 1
    wblk1 = wblk1 * bn1s[:, None]
    wblk3 = (wblk3 * bn3s[:, None]).at[:, 9 * Cm].set(bn3b)

    return {
        "Cm": Cm,
        "in_dtype": in_dtype,
        "w0T": params["w0"].T.astype(in_dtype),
        "wlowT": (params["wlow"].T * bn2s[:, None]).astype(in_dtype),
        "wblk1T_low": wblk1.at[:, 9 * Cm].set(bn1b + bn2b),
        "wblk1T_nolow": wblk1.at[:, 9 * Cm].set(bn1b),
        "wblk3T": wblk3,
        "alpha1": params["alpha1"].reshape(Cm, 1).astype(f32),
        "alpha2": params["alpha2"].reshape(1, 1).astype(f32),
    }


@functools.lru_cache(maxsize=None)
def _edge_masks(H, W):
    """Left/right zero-padding masks for the flat-shift tap extraction."""
    x = np.arange(H * W, dtype=np.int64) % W
    m = np.stack([x >= 1,          # dil=1, kx=0
                  x <= W - 2,      # dil=1, kx=2
                  x >= 2,          # dil=2, kx=0
                  x <= W - 3],     # dil=2, kx=2
                 axis=0).astype(np.float32)
    return jnp.asarray(m)


# --------------------------------------------------------------------------
# PyTorch-compatible forward (NCHW in / NCHW out, no transposes)
# --------------------------------------------------------------------------
def conbine_feature_forward(prep, high_fea_nchw, low_fea_nchw=None):
    B, Ch, H, W = high_fea_nchw.shape
    HW = H * W
    Cm = prep["Cm"]
    idt = prep["in_dtype"]
    out_dtype = high_fea_nchw.dtype

    masks = _edge_masks(H, W)
    high = high_fea_nchw.reshape(B, Ch, HW).astype(idt)

    if low_fea_nchw is None:
        fn = _get_pallas_fn(B, H, W, Ch, 0, Cm, idt, out_dtype, False)
        out = fn(high, prep["w0T"], prep["wblk1T_nolow"], prep["wblk3T"],
                 prep["alpha1"], prep["alpha2"], masks)
    else:
        Cl = low_fea_nchw.shape[1]
        low = low_fea_nchw.reshape(B, Cl, HW).astype(idt)
        fn = _get_pallas_fn(B, H, W, Ch, Cl, Cm, idt, out_dtype, True)
        out = fn(high, low, prep["w0T"], prep["wlowT"], prep["wblk1T_low"],
                 prep["wblk3T"], prep["alpha1"], prep["alpha2"], masks)

    return out.reshape(B, Cm, H, W)


# --------------------------------------------------------------------------
# parameter init + pure-JAX reference (for verification)
# --------------------------------------------------------------------------
def init_params(key, high_channel=128, low_channel=128, middle_channel=16):
    Cm = middle_channel
    n = -(-Cm // 2)
    n2 = Cm - n
    ks = jax.random.split(key, 11)

    def w(k, shape, fan_in):
        return (jax.random.normal(k, shape, jnp.float32)
                / jnp.sqrt(jnp.float32(fan_in)))

    def bn(kg, kb, c):
        gamma = 1.0 + 0.1 * jax.random.normal(kg, (c,), jnp.float32)
        beta = 0.1 * jax.random.normal(kb, (c,), jnp.float32)
        mean = 0.05 * jnp.arange(c, dtype=jnp.float32) - 0.3
        var = 1.0 + 0.02 * jnp.arange(c, dtype=jnp.float32)
        scale = gamma * jax.lax.rsqrt(var + 1e-5)
        bias = beta - mean * scale
        return scale.reshape(1, c), bias.reshape(1, c)

    params = {
        "w0":   w(ks[0], (high_channel, Cm), high_channel),   # 1x1 conv
        "w1":   w(ks[1], (3, 3, n, n), 9 * n),                # 3x3 dil=1
        "w2":   w(ks[2], (3, 3, n2, n2), 9 * max(n2, 1)),     # 3x3 dil=2
        "wlow": w(ks[3], (low_channel, Cm), low_channel),     # 1x1 conv
        "wref": w(ks[4], (3, 3, Cm, Cm), 9 * Cm),             # refine 3x3
    }
    params["bn1s"], params["bn1b"] = bn(ks[5], ks[6], Cm)
    params["bn2s"], params["bn2b"] = bn(ks[7], ks[8], Cm)
    params["bn3s"], params["bn3b"] = bn(ks[9], ks[10], Cm)
    params["alpha1"] = jnp.full((1, Cm), 0.25, jnp.float32)   # PReLU(Cm)
    params["alpha2"] = jnp.full((1, 1), 0.25, jnp.float32)    # PReLU()
    return params


def reference_forward(params, high_fea_nchw, low_fea_nchw=None):
    """Pure-JAX f32 reference of the PyTorch module (inference-mode BN)."""
    f32 = jnp.float32
    Cm = params["w0"].shape[-1]
    n = -(-Cm // 2)

    def conv(x, w, pad, dil):
        return jax.lax.conv_general_dilated(
            x, w, window_strides=(1, 1),
            padding=((pad, pad), (pad, pad)), rhs_dilation=(dil, dil),
            dimension_numbers=("NHWC", "HWIO", "NHWC"))

    def bn(x, s, b):
        return x * s.reshape(1, 1, 1, -1) + b.reshape(1, 1, 1, -1)

    high = jnp.transpose(high_fea_nchw, (0, 2, 3, 1)).astype(f32)
    in0 = jnp.einsum("bhwc,cd->bhwd", high, params["w0"])
    hi = jnp.concatenate([conv(in0[..., :n], params["w1"], 1, 1),
                          conv(in0[..., n:], params["w2"], 2, 2)], axis=-1)
    hi = bn(hi, params["bn1s"], params["bn1b"])
    if low_fea_nchw is not None:
        low = jnp.transpose(low_fea_nchw, (0, 2, 3, 1)).astype(f32)
        lo = bn(jnp.einsum("bhwc,cd->bhwd", low, params["wlow"]),
                params["bn2s"], params["bn2b"])
        hi = hi + lo
    a1 = params["alpha1"].reshape(1, 1, 1, Cm)
    act = jnp.where(hi > 0, hi, a1 * hi)
    y = bn(conv(act, params["wref"], 1, 1), params["bn3s"], params["bn3b"])
    y = jnp.where(y > 0, y, params["alpha2"].reshape(1, 1, 1, 1) * y)
    return jnp.transpose(y, (0, 3, 1, 2))


# --------------------------------------------------------------------------
if __name__ == "__main__":
    B, H, W = 2, 16, 16
    high_channel, low_channel, middle_channel = 32, 32, 16

    key = jax.random.PRNGKey(0)
    k_p, k_h, k_l = jax.random.split(key, 3)
    params = init_params(k_p, high_channel, low_channel, middle_channel)
    prep = prepare_params(params)             # one-time BN folding / casts

    high_fea = jax.random.normal(k_h, (B, high_channel, H, W), jnp.float32)
    low_fea = jax.random.normal(k_l, (B, low_channel, H, W), jnp.float32)

    out = jax.block_until_ready(
        conbine_feature_forward(prep, high_fea, low_fea))
    assert out.shape == (B, middle_channel, H, W)
    assert bool(jnp.all(jnp.isfinite(out)))
    ref = reference_forward(params, high_fea, low_fea)
    assert bool(jnp.allclose(out, ref, atol=2e-1, rtol=5e-2)), (
        "max abs err %f" % float(jnp.max(jnp.abs(out - ref))))

    # low_fea=None path exercises the dedicated (no-low) kernel variant
    out2 = jax.block_until_ready(conbine_feature_forward(prep, high_fea))
    assert out2.shape == (B, middle_channel, H, W)
    assert bool(jnp.all(jnp.isfinite(out2)))
    ref2 = reference_forward(params, high_fea)
    assert bool(jnp.allclose(out2, ref2, atol=2e-1, rtol=5e-2)), (
        "max abs err %f" % float(jnp.max(jnp.abs(out2 - ref2))))

    print("KERNEL_OK")
</pallas_src>

<mosaic_0001>
module attributes {stable_mosaic.version = 11 : i64} {
  func.func @kernel(%arg0: i32, %arg1: memref<1x32x256xbf16, #tpu.memory_space<vmem>>, %arg2: memref<1x32x256xbf16, #tpu.memory_space<vmem>>, %arg3: memref<16x32xbf16, #tpu.memory_space<vmem>>, %arg4: memref<16x32xbf16, #tpu.memory_space<vmem>>, %arg5: memref<16x145xf32, #tpu.memory_space<vmem>>, %arg6: memref<16x145xf32, #tpu.memory_space<vmem>>, %arg7: memref<16x1xf32, #tpu.memory_space<vmem>>, %arg8: memref<1x1xf32, #tpu.memory_space<vmem>>, %arg9: memref<4x256xf32, #tpu.memory_space<vmem>>, %arg10: memref<1x16x256xf32, #tpu.memory_space<vmem>>, %arg11: memref<16x324xf32, #tpu.memory_space<vmem>>, %arg12: memref<145x256xf32, #tpu.memory_space<vmem>>) attributes {dimension_semantics = [#tpu.dimension_semantics<parallel>], iteration_bounds = array<i64: 2>, scalar_prefetch = 0 : i64, scratch_operands = 2 : i64, tpu.core_type = #tpu.core_type<tc>, window_params = [{transform_indices = @transform_0, window_bounds = array<i64: 1, 32, 256>}, {transform_indices = @transform_1, window_bounds = array<i64: 1, 32, 256>}, {pipeline_mode = #tpu.pipeline_mode<synchronous>, transform_indices = @transform_2, window_bounds = array<i64: 16, 32>}, {pipeline_mode = #tpu.pipeline_mode<synchronous>, transform_indices = @transform_3, window_bounds = array<i64: 16, 32>}, {pipeline_mode = #tpu.pipeline_mode<synchronous>, transform_indices = @transform_4, window_bounds = array<i64: 16, 145>}, {pipeline_mode = #tpu.pipeline_mode<synchronous>, transform_indices = @transform_5, window_bounds = array<i64: 16, 145>}, {pipeline_mode = #tpu.pipeline_mode<synchronous>, transform_indices = @transform_6, window_bounds = array<i64: 16, 1>}, {pipeline_mode = #tpu.pipeline_mode<synchronous>, transform_indices = @transform_7, window_bounds = array<i64: 1, 1>}, {pipeline_mode = #tpu.pipeline_mode<synchronous>, transform_indices = @transform_8, window_bounds = array<i64: 4, 256>}, {transform_indices = @transform_9, window_bounds = array<i64: 1, 16, 256>}]} {
    %c0 = arith.constant 0 : index
    %c0_0 = arith.constant 0 : index
    %0 = vector.load %arg3[%c0, %c0_0] : memref<16x32xbf16, #tpu.memory_space<vmem>>, vector<16x32xbf16>
    %c0_1 = arith.constant 0 : index
    %c0_2 = arith.constant 0 : index
    %c0_3 = arith.constant 0 : index
    %1 = vector.load %arg1[%c0_1, %c0_2, %c0_3] : memref<1x32x256xbf16, #tpu.memory_space<vmem>>, vector<1x32x256xbf16>
    %2 = vector.shape_cast %1 : vector<1x32x256xbf16> to vector<32x256xbf16>
    %cst = arith.constant dense<0.000000e+00> : vector<16x256xf32>
    %3 = tpu.matmul %0, %2, %cst {dimension_numbers = #tpu.dot_dimension_numbers<[1], [0], [0], [1], [0, 0, 1, 1], [], []>} : vector<16x32xbf16>, vector<32x256xbf16>, vector<16x256xf32> -> vector<16x256xf32>
    %cst_4 = arith.constant 0.000000e+00 : f32
    %4 = vector.broadcast %cst_4 : f32 to vector<16x34xf32>
    %c0_5 = arith.constant 0 : index
    %c0_6 = arith.constant 0 : index
    %5 = vector.load %arg11[%c0_5, %c0_6] : memref<16x324xf32, #tpu.memory_space<vmem>>, vector<16x34xf32>
    tpu.vector_store %arg11[%c0_5, %c0_6], %4 {strides = array<i32>} : memref<16x324xf32, #tpu.memory_space<vmem>>, vector<16x34xf32>,
    %cst_7 = arith.constant 0.000000e+00 : f32
    %6 = vector.broadcast %cst_7 : f32 to vector<16x34xf32>
    %c0_8 = arith.constant 0 : index
    %c290 = arith.constant 290 : index
    %7 = vector.load %arg11[%c0_8, %c290] : memref<16x324xf32, #tpu.memory_space<vmem>>, vector<16x34xf32>
    tpu.vector_store %arg11[%c0_8, %c290], %6 {strides = array<i32>} : memref<16x324xf32, #tpu.memory_space<vmem>>, vector<16x34xf32>,
    %c0_9 = arith.constant 0 : index
    %c34 = arith.constant 34 : index
    %8 = vector.load %arg11[%c0_9, %c34] : memref<16x324xf32, #tpu.memory_space<vmem>>, vector<16x256xf32>
    tpu.vector_store %arg11[%c0_9, %c34], %3 {strides = array<i32>} : memref<16x324xf32, #tpu.memory_space<vmem>>, vector<16x256xf32>,
    %cst_10 = arith.constant 1.000000e+00 : f32
    %9 = vector.broadcast %cst_10 : f32 to vector<1x256xf32>
    %c144 = arith.constant 144 : index
    %c0_11 = arith.constant 0 : index
    %10 = vector.load %arg12[%c144, %c0_11] : memref<145x256xf32, #tpu.memory_space<vmem>>, vector<1x256xf32>
    tpu.vector_store %arg12[%c144, %c0_11], %9 {strides = array<i32>} : memref<145x256xf32, #tpu.memory_space<vmem>>, vector<1x256xf32>,
    %c0_12 = arith.constant 0 : index
    %c17 = arith.constant 17 : index
    %11 = vector.load %arg11[%c0_12, %c17] : memref<16x324xf32, #tpu.memory_space<vmem>>, vector<8x256xf32>
    %c0_13 = arith.constant 0 : index
    %c0_14 = arith.constant 0 : index
    %12 = vector.load %arg9[%c0_13, %c0_14] : memref<4x256xf32, #tpu.memory_space<vmem>>, vector<1x256xf32>
    %13 = vector.broadcast %12 : vector<1x256xf32> to vector<8x256xf32>
    %14 = arith.mulf %11, %13 : vector<8x256xf32>
    %c0_15 = arith.constant 0 : index
    %c0_16 = arith.constant 0 : index
    %15 = vector.load %arg12[%c0_15, %c0_16] : memref<145x256xf32, #tpu.memory_space<vmem>>, vector<8x256xf32>
    tpu.vector_store %arg12[%c0_15, %c0_16], %14 {strides = array<i32>} : memref<145x256xf32, #tpu.memory_space<vmem>>, vector<8x256xf32>,
    %c8 = arith.constant 8 : index
    %c0_17 = arith.constant 0 : index
    %16 = vector.load %arg11[%c8, %c0_17] : memref<16x324xf32, #tpu.memory_space<vmem>>, vector<8x256xf32>
    %c2 = arith.constant 2 : index
    %c0_18 = arith.constant 0 : index
    %17 = vector.load %arg9[%c2, %c0_18] : memref<4x256xf32, #tpu.memory_space<vmem>>, vector<1x256xf32>
    %18 = vector.broadcast %17 : vector<1x256xf32> to vector<8x256xf32>
    %19 = arith.mulf %16, %18 : vector<8x256xf32>
    %c72 = arith.constant 72 : index
    %c0_19 = arith.constant 0 : index
    %20 = vector.load %arg12[%c72, %c0_19] : memref<145x256xf32, #tpu.memory_space<vmem>>, vector<8x256xf32>
    tpu.vector_store %arg12[%c72, %c0_19], %19 {strides = array<i32>} : memref<145x256xf32, #tpu.memory_space<vmem>>, vector<8x256xf32>,
    %c0_20 = arith.constant 0 : index
    %c18 = arith.constant 18 : index
    %21 = vector.load %arg11[%c0_20, %c18] : memref<16x324xf32, #tpu.memory_space<vmem>>, vector<8x256xf32>
    %c8_21 = arith.constant 8 : index
    %c0_22 = arith.constant 0 : index
    %22 = vector.load %arg12[%c8_21, %c0_22] : memref<145x256xf32, #tpu.memory_space<vmem>>, vector<8x256xf32>
    tpu.vector_store %arg12[%c8_21, %c0_22], %21 {strides = array<i32>} : memref<145x256xf32, #tpu.memory_space<vmem>>, vector<8x256xf32>,
    %c8_23 = arith.constant 8 : index
    %c2_24 = arith.constant 2 : index
    %23 = vector.load %arg11[%c8_23, %c2_24] : memref<16x324xf32, #tpu.memory_space<vmem>>, vector<8x256xf32>
    %c80 = arith.constant 80 : index
    %c0_25 = arith.constant 0 : index
    %24 = vector.load %arg12[%c80, %c0_25] : memref<145x256xf32, #tpu.memory_space<vmem>>, vector<8x256xf32>
    tpu.vector_store %arg12[%c80, %c0_25], %23 {strides = array<i32>} : memref<145x256xf32, #tpu.memory_space<vmem>>, vector<8x256xf32>,
    %c0_26 = arith.constant 0 : index
    %c19 = arith.constant 19 : index
    %25 = vector.load %arg11[%c0_26, %c19] : memref<16x324xf32, #tpu.memory_space<vmem>>, vector<8x256xf32>
    %c1 = arith.constant 1 : index
    %c0_27 = arith.constant 0 : index
    %26 = vector.load %arg9[%c1, %c0_27] : memref<4x256xf32, #tpu.memory_space<vmem>>, vector<1x256xf32>
    %27 = vector.broadcast %26 : vector<1x256xf32> to vector<8x256xf32>
    %28 = arith.mulf %25, %27 : vector<8x256xf32>
    %c16 = arith.constant 16 : index
    %c0_28 = arith.constant 0 : index
    %29 = vector.load %arg12[%c16, %c0_28] : memref<145x256xf32, #tpu.memory_space<vmem>>, vector<8x256xf32>
    tpu.vector_store %arg12[%c16, %c0_28], %28 {strides = array<i32>} : memref<145x256xf32, #tpu.memory_space<vmem>>, vector<8x256xf32>,
    %c8_29 = arith.constant 8 : index
    %c4 = arith.constant 4 : index
    %30 = vector.load %arg11[%c8_29, %c4] : memref<16x324xf32, #tpu.memory_space<vmem>>, vector<8x256xf32>
    %c3 = arith.constant 3 : index
    %c0_30 = arith.constant 0 : index
    %31 = vector.load %arg9[%c3, %c0_30] : memref<4x256xf32, #tpu.memory_space<vmem>>, vector<1x256xf32>
    %32 = vector.broadcast %31 : vector<1x256xf32> to vector<8x256xf32>
    %33 = arith.mulf %30, %32 : vector<8x256xf32>
    %c88 = arith.constant 88 : index
    %c0_31 = arith.constant 0 : index
    %34 = vector.load %arg12[%c88, %c0_31] : memref<145x256xf32, #tpu.memory_space<vmem>>, vector<8x256xf32>
    tpu.vector_store %arg12[%c88, %c0_31], %33 {strides = array<i32>} : memref<145x256xf32, #tpu.memory_space<vmem>>, vector<8x256xf32>,
    %c0_32 = arith.constant 0 : index
    %c33 = arith.constant 33 : index
    %35 = vector.load %arg11[%c0_32, %c33] : memref<16x324xf32, #tpu.memory_space<vmem>>, vector<8x256xf32>
    %c0_33 = arith.constant 0 : index
    %c0_34 = arith.constant 0 : index
    %36 = vector.load %arg9[%c0_33, %c0_34] : memref<4x256xf32, #tpu.memory_space<vmem>>, vector<1x256xf32>
    %37 = vector.broadcast %36 : vector<1x256xf32> to vector<8x256xf32>
    %38 = arith.mulf %35, %37 : vector<8x256xf32>
    %c24 = arith.constant 24 : index
    %c0_35 = arith.constant 0 : index
    %39 = vector.load %arg12[%c24, %c0_35] : memref<145x256xf32, #tpu.memory_space<vmem>>, vector<8x256xf32>
    tpu.vector_store %arg12[%c24, %c0_35], %38 {strides = array<i32>} : memref<145x256xf32, #tpu.memory_space<vmem>>, vector<8x256xf32>,
    %c8_36 = arith.constant 8 : index
    %c32 = arith.constant 32 : index
    %40 = vector.load %arg11[%c8_36, %c32] : memref<16x324xf32, #tpu.memory_space<vmem>>, vector<8x256xf32>
    %c2_37 = arith.constant 2 : index
    %c0_38 = arith.constant 0 : index
    %41 = vector.load %arg9[%c2_37, %c0_38] : memref<4x256xf32, #tpu.memory_space<vmem>>, vector<1x256xf32>
    %42 = vector.broadcast %41 : vector<1x256xf32> to vector<8x256xf32>
    %43 = arith.mulf %40, %42 : vector<8x256xf32>
    %c96 = arith.constant 96 : index
    %c0_39 = arith.constant 0 : index
    %44 = vector.load %arg12[%c96, %c0_39] : memref<145x256xf32, #tpu.memory_space<vmem>>, vector<8x256xf32>
    tpu.vector_store %arg12[%c96, %c0_39], %43 {strides = array<i32>} : memref<145x256xf32, #tpu.memory_space<vmem>>, vector<8x256xf32>,
    %c0_40 = arith.constant 0 : index
    %c34_41 = arith.constant 34 : index
    %45 = vector.load %arg11[%c0_40, %c34_41] : memref<16x324xf32, #tpu.memory_space<vmem>>, vector<8x256xf32>
    %c32_42 = arith.constant 32 : index
    %c0_43 = arith.constant 0 : index
    %46 = vector.load %arg12[%c32_42, %c0_43] : memref<145x256xf32, #tpu.memory_space<vmem>>, vector<8x256xf32>
    tpu.vector_store %arg12[%c32_42, %c0_43], %45 {strides = array<i32>} : memref<145x256xf32, #tpu.memory_space<vmem>>, vector<8x256xf32>,
    %c8_44 = arith.constant 8 : index
    %c34_45 = arith.constant 34 : index
    %47 = vector.load %arg11[%c8_44, %c34_45] : memref<16x324xf32, #tpu.memory_space<vmem>>, vector<8x256xf32>
    %c104 = arith.constant 104 : index
    %c0_46 = arith.constant 0 : index
    %48 = vector.load %arg12[%c104, %c0_46] : memref<145x256xf32, #tpu.memory_space<vmem>>, vector<8x256xf32>
    tpu.vector_store %arg12[%c104, %c0_46], %47 {strides = array<i32>} : memref<145x256xf32, #tpu.memory_space<vmem>>, vector<8x256xf32>,
    %c0_47 = arith.constant 0 : index
    %c35 = arith.constant 35 : index
    %49 = vector.load %arg11[%c0_47, %c35] : memref<16x324xf32, #tpu.memory_space<vmem>>, vector<8x256xf32>
    %c1_48 = arith.constant 1 : index
    %c0_49 = arith.constant 0 : index
    %50 = vector.load %arg9[%c1_48, %c0_49] : memref<4x256xf32, #tpu.memory_space<vmem>>, vector<1x256xf32>
    %51 = vector.broadcast %50 : vector<1x256xf32> to vector<8x256xf32>
    %52 = arith.mulf %49, %51 : vector<8x256xf32>
    %c40 = arith.constant 40 : index
    %c0_50 = arith.constant 0 : index
    %53 = vector.load %arg12[%c40, %c0_50] : memref<145x256xf32, #tpu.memory_space<vmem>>, vector<8x256xf32>
    tpu.vector_store %arg12[%c40, %c0_50], %52 {strides = array<i32>} : memref<145x256xf32, #tpu.memory_space<vmem>>, vector<8x256xf32>,
    %c8_51 = arith.constant 8 : index
    %c36 = arith.constant 36 : index
    %54 = vector.load %arg11[%c8_51, %c36] : memref<16x324xf32, #tpu.memory_space<vmem>>, vector<8x256xf32>
    %c3_52 = arith.constant 3 : index
    %c0_53 = arith.constant 0 : index
    %55 = vector.load %arg9[%c3_52, %c0_53] : memref<4x256xf32, #tpu.memory_space<vmem>>, vector<1x256xf32>
    %56 = vector.broadcast %55 : vector<1x256xf32> to vector<8x256xf32>
    %57 = arith.mulf %54, %56 : vector<8x256xf32>
    %c112 = arith.constant 112 : index
    %c0_54 = arith.constant 0 : index
    %58 = vector.load %arg12[%c112, %c0_54] : memref<145x256xf32, #tpu.memory_space<vmem>>, vector<8x256xf32>
    tpu.vector_store %arg12[%c112, %c0_54], %57 {strides = array<i32>} : memref<145x256xf32, #tpu.memory_space<vmem>>, vector<8x256xf32>,
    %c0_55 = arith.constant 0 : index
    %c49 = arith.constant 49 : index
    %59 = vector.load %arg11[%c0_55, %c49] : memref<16x324xf32, #tpu.memory_space<vmem>>, vector<8x256xf32>
    %c0_56 = arith.constant 0 : index
    %c0_57 = arith.constant 0 : index
    %60 = vector.load %arg9[%c0_56, %c0_57] : memref<4x256xf32, #tpu.memory_space<vmem>>, vector<1x256xf32>
    %61 = vector.broadcast %60 : vector<1x256xf32> to vector<8x256xf32>
    %62 = arith.mulf %59, %61 : vector<8x256xf32>
    %c48 = arith.constant 48 : index
    %c0_58 = arith.constant 0 : index
    %63 = vector.load %arg12[%c48, %c0_58] : memref<145x256xf32, #tpu.memory_space<vmem>>, vector<8x256xf32>
    tpu.vector_store %arg12[%c48, %c0_58], %62 {strides = array<i32>} : memref<145x256xf32, #tpu.memory_space<vmem>>, vector<8x256xf32>,
    %c8_59 = arith.constant 8 : index
    %c64 = arith.constant 64 : index
    %64 = vector.load %arg11[%c8_59, %c64] : memref<16x324xf32, #tpu.memory_space<vmem>>, vector<8x256xf32>
    %c2_60 = arith.constant 2 : index
    %c0_61 = arith.constant 0 : index
    %65 = vector.load %arg9[%c2_60, %c0_61] : memref<4x256xf32, #tpu.memory_space<vmem>>, vector<1x256xf32>
    %66 = vector.broadcast %65 : vector<1x256xf32> to vector<8x256xf32>
    %67 = arith.mulf %64, %66 : vector<8x256xf32>
    %c120 = arith.constant 120 : index
    %c0_62 = arith.constant 0 : index
    %68 = vector.load %arg12[%c120, %c0_62] : memref<145x256xf32, #tpu.memory_space<vmem>>, vector<8x256xf32>
    tpu.vector_store %arg12[%c120, %c0_62], %67 {strides = array<i32>} : memref<145x256xf32, #tpu.memory_space<vmem>>, vector<8x256xf32>,
    %c0_63 = arith.constant 0 : index
    %c50 = arith.constant 50 : index
    %69 = vector.load %arg11[%c0_63, %c50] : memref<16x324xf32, #tpu.memory_space<vmem>>, vector<8x256xf32>
    %c56 = arith.constant 56 : index
    %c0_64 = arith.constant 0 : index
    %70 = vector.load %arg12[%c56, %c0_64] : memref<145x256xf32, #tpu.memory_space<vmem>>, vector<8x256xf32>
    tpu.vector_store %arg12[%c56, %c0_64], %69 {strides = array<i32>} : memref<145x256xf32, #tpu.memory_space<vmem>>, vector<8x256xf32>,
    %c8_65 = arith.constant 8 : index
    %c66 = arith.constant 66 : index
    %71 = vector.load %arg11[%c8_65, %c66] : memref<16x324xf32, #tpu.memory_space<vmem>>, vector<8x256xf32>
    %c128 = arith.constant 128 : index
    %c0_66 = arith.constant 0 : index
    %72 = vector.load %arg12[%c128, %c0_66] : memref<145x256xf32, #tpu.memory_space<vmem>>, vector<8x256xf32>
    tpu.vector_store %arg12[%c128, %c0_66], %71 {strides = array<i32>} : memref<145x256xf32, #tpu.memory_space<vmem>>, vector<8x256xf32>,
    %c0_67 = arith.constant 0 : index
    %c51 = arith.constant 51 : index
    %73 = vector.load %arg11[%c0_67, %c51] : memref<16x324xf32, #tpu.memory_space<vmem>>, vector<8x256xf32>
    %c1_68 = arith.constant 1 : index
    %c0_69 = arith.constant 0 : index
    %74 = vector.load %arg9[%c1_68, %c0_69] : memref<4x256xf32, #tpu.memory_space<vmem>>, vector<1x256xf32>
    %75 = vector.broadcast %74 : vector<1x256xf32> to vector<8x256xf32>
    %76 = arith.mulf %73, %75 : vector<8x256xf32>
    %c64_70 = arith.constant 64 : index
    %c0_71 = arith.constant 0 : index
    %77 = vector.load %arg12[%c64_70, %c0_71] : memref<145x256xf32, #tpu.memory_space<vmem>>, vector<8x256xf32>
    tpu.vector_store %arg12[%c64_70, %c0_71], %76 {strides = array<i32>} : memref<145x256xf32, #tpu.memory_space<vmem>>, vector<8x256xf32>,
    %c8_72 = arith.constant 8 : index
    %c68 = arith.constant 68 : index
    %78 = vector.load %arg11[%c8_72, %c68] : memref<16x324xf32, #tpu.memory_space<vmem>>, vector<8x256xf32>
    %c3_73 = arith.constant 3 : index
    %c0_74 = arith.constant 0 : index
    %79 = vector.load %arg9[%c3_73, %c0_74] : memref<4x256xf32, #tpu.memory_space<vmem>>, vector<1x256xf32>
    %80 = vector.broadcast %79 : vector<1x256xf32> to vector<8x256xf32>
    %81 = arith.mulf %78, %80 : vector<8x256xf32>
    %c136 = arith.constant 136 : index
    %c0_75 = arith.constant 0 : index
    %82 = vector.load %arg12[%c136, %c0_75] : memref<145x256xf32, #tpu.memory_space<vmem>>, vector<8x256xf32>
    tpu.vector_store %arg12[%c136, %c0_75], %81 {strides = array<i32>} : memref<145x256xf32, #tpu.memory_space<vmem>>, vector<8x256xf32>,
    %c0_76 = arith.constant 0 : index
    %c0_77 = arith.constant 0 : index
    %83 = vector.load %arg5[%c0_76, %c0_77] : memref<16x145xf32, #tpu.memory_space<vmem>>, vector<16x145xf32>
    %c0_78 = arith.constant 0 : index
    %c0_79 = arith.constant 0 : index
    %84 = vector.load %arg12[%c0_78, %c0_79] : memref<145x256xf32, #tpu.memory_space<vmem>>, vector<145x256xf32>
    %cst_80 = arith.constant dense<0.000000e+00> : vector<16x256xf32>
    %85 = tpu.matmul %83, %84, %cst_80 {dimension_numbers = #tpu.dot_dimension_numbers<[1], [0], [0], [1], [0, 0, 1, 1], [], []>} : vector<16x145xf32>, vector<145x256xf32>, vector<16x256xf32> -> vector<16x256xf32>
    %c0_81 = arith.constant 0 : index
    %c0_82 = arith.constant 0 : index
    %86 = vector.load %arg4[%c0_81, %c0_82] : memref<16x32xbf16, #tpu.memory_space<vmem>>, vector<16x32xbf16>
    %c0_83 = arith.constant 0 : index
    %c0_84 = arith.constant 0 : index
    %c0_85 = arith.constant 0 : index
    %87 = vector.load %arg2[%c0_83, %c0_84, %c0_85] : memref<1x32x256xbf16, #tpu.memory_space<vmem>>, vector<1x32x256xbf16>
    %88 = vector.shape_cast %87 : vector<1x32x256xbf16> to vector<32x256xbf16>
    %cst_86 = arith.constant dense<0.000000e+00> : vector<16x256xf32>
    %89 = tpu.matmul %86, %88, %cst_86 {dimension_numbers = #tpu.dot_dimension_numbers<[1], [0], [0], [1], [0, 0, 1, 1], [], []>} : vector<16x32xbf16>, vector<32x256xbf16>, vector<16x256xf32> -> vector<16x256xf32>
    %90 = arith.addf %85, %89 : vector<16x256xf32>
    %cst_87 = arith.constant 0.000000e+00 : f32
    %91 = vector.broadcast %cst_87 : f32 to vector<16x256xf32>
    %92 = arith.cmpf ogt, %90, %91 : vector<16x256xf32>
    %c0_88 = arith.constant 0 : index
    %c0_89 = arith.constant 0 : index
    %93 = vector.load %arg7[%c0_88, %c0_89] : memref<16x1xf32, #tpu.memory_space<vmem>>, vector<16x1xf32>
    %94 = vector.broadcast %93 : vector<16x1xf32> to vector<16x256xf32>
    %95 = arith.mulf %94, %90 : vector<16x256xf32>
    %96 = arith.select %92, %90, %95 : vector<16x256xi1>, vector<16x256xf32>
    %c0_90 = arith.constant 0 : index
    %c34_91 = arith.constant 34 : index
    %97 = vector.load %arg11[%c0_90, %c34_91] : memref<16x324xf32, #tpu.memory_space<vmem>>, vector<16x256xf32>
    tpu.vector_store %arg11[%c0_90, %c34_91], %96 {strides = array<i32>} : memref<16x324xf32, #tpu.memory_space<vmem>>, vector<16x256xf32>,
    %c0_92 = arith.constant 0 : index
    %c17_93 = arith.constant 17 : index
    %98 = vector.load %arg11[%c0_92, %c17_93] : memref<16x324xf32, #tpu.memory_space<vmem>>, vector<16x256xf32>
    %c0_94 = arith.constant 0 : index
    %c0_95 = arith.constant 0 : index
    %99 = vector.load %arg9[%c0_94, %c0_95] : memref<4x256xf32, #tpu.memory_space<vmem>>, vector<1x256xf32>
    %100 = vector.broadcast %99 : vector<1x256xf32> to vector<16x256xf32>
    %101 = arith.mulf %98, %100 : vector<16x256xf32>
    %c0_96 = arith.constant 0 : index
    %c0_97 = arith.constant 0 : index
    %102 = vector.load %arg12[%c0_96, %c0_97] : memref<145x256xf32, #tpu.memory_space<vmem>>, vector<16x256xf32>
    tpu.vector_store %arg12[%c0_96, %c0_97], %101 {strides = array<i32>} : memref<145x256xf32, #tpu.memory_space<vmem>>, vector<16x256xf32>,
    %c0_98 = arith.constant 0 : index
    %c18_99 = arith.constant 18 : index
    %103 = vector.load %arg11[%c0_98, %c18_99] : memref<16x324xf32, #tpu.memory_space<vmem>>, vector<16x256xf32>
    %c16_100 = arith.constant 16 : index
    %c0_101 = arith.constant 0 : index
    %104 = vector.load %arg12[%c16_100, %c0_101] : memref<145x256xf32, #tpu.memory_space<vmem>>, vector<16x256xf32>
    tpu.vector_store %arg12[%c16_100, %c0_101], %103 {strides = array<i32>} : memref<145x256xf32, #tpu.memory_space<vmem>>, vector<16x256xf32>,
    %c0_102 = arith.constant 0 : index
    %c19_103 = arith.constant 19 : index
    %105 = vector.load %arg11[%c0_102, %c19_103] : memref<16x324xf32, #tpu.memory_space<vmem>>, vector<16x256xf32>
    %c1_104 = arith.constant 1 : index
    %c0_105 = arith.constant 0 : index
    %106 = vector.load %arg9[%c1_104, %c0_105] : memref<4x256xf32, #tpu.memory_space<vmem>>, vector<1x256xf32>
    %107 = vector.broadcast %106 : vector<1x256xf32> to vector<16x256xf32>
    %108 = arith.mulf %105, %107 : vector<16x256xf32>
    %c32_106 = arith.constant 32 : index
    %c0_107 = arith.constant 0 : index
    %109 = vector.load %arg12[%c32_106, %c0_107] : memref<145x256xf32, #tpu.memory_space<vmem>>, vector<16x256xf32>
    tpu.vector_store %arg12[%c32_106, %c0_107], %108 {strides = array<i32>} : memref<145x256xf32, #tpu.memory_space<vmem>>, vector<16x256xf32>,
    %c0_108 = arith.constant 0 : index
    %c33_109 = arith.constant 33 : index
    %110 = vector.load %arg11[%c0_108, %c33_109] : memref<16x324xf32, #tpu.memory_space<vmem>>, vector<16x256xf32>
    %c0_110 = arith.constant 0 : index
    %c0_111 = arith.constant 0 : index
    %111 = vector.load %arg9[%c0_110, %c0_111] : memref<4x256xf32, #tpu.memory_space<vmem>>, vector<1x256xf32>
    %112 = vector.broadcast %111 : vector<1x256xf32> to vector<16x256xf32>
    %113 = arith.mulf %110, %112 : vector<16x256xf32>
    %c48_112 = arith.constant 48 : index
    %c0_113 = arith.constant 0 : index
    %114 = vector.load %arg12[%c48_112, %c0_113] : memref<145x256xf32, #tpu.memory_space<vmem>>, vector<16x256xf32>
    tpu.vector_store %arg12[%c48_112, %c0_113], %113 {strides = array<i32>} : memref<145x256xf32, #tpu.memory_space<vmem>>, vector<16x256xf32>,
    %c0_114 = arith.constant 0 : index
    %c34_115 = arith.constant 34 : index
    %115 = vector.load %arg11[%c0_114, %c34_115] : memref<16x324xf32, #tpu.memory_space<vmem>>, vector<16x256xf32>
    %c64_116 = arith.constant 64 : index
    %c0_117 = arith.constant 0 : index
    %116 = vector.load %arg12[%c64_116, %c0_117] : memref<145x256xf32, #tpu.memory_space<vmem>>, vector<16x256xf32>
    tpu.vector_store %arg12[%c64_116, %c0_117], %115 {strides = array<i32>} : memref<145x256xf32, #tpu.memory_space<vmem>>, vector<16x256xf32>,
    %c0_118 = arith.constant 0 : index
    %c35_119 = arith.constant 35 : index
    %117 = vector.load %arg11[%c0_118, %c35_119] : memref<16x324xf32, #tpu.memory_space<vmem>>, vector<16x256xf32>
    %c1_120 = arith.constant 1 : index
    %c0_121 = arith.constant 0 : index
    %118 = vector.load %arg9[%c1_120, %c0_121] : memref<4x256xf32, #tpu.memory_space<vmem>>, vector<1x256xf32>
    %119 = vector.broadcast %118 : vector<1x256xf32> to vector<16x256xf32>
    %120 = arith.mulf %117, %119 : vector<16x256xf32>
    %c80_122 = arith.constant 80 : index
    %c0_123 = arith.constant 0 : index
    %121 = vector.load %arg12[%c80_122, %c0_123] : memref<145x256xf32, #tpu.memory_space<vmem>>, vector<16x256xf32>
    tpu.vector_store %arg12[%c80_122, %c0_123], %120 {strides = array<i32>} : memref<145x256xf32, #tpu.memory_space<vmem>>, vector<16x256xf32>,
    %c0_124 = arith.constant 0 : index
    %c49_125 = arith.constant 49 : index
    %122 = vector.load %arg11[%c0_124, %c49_125] : memref<16x324xf32, #tpu.memory_space<vmem>>, vector<16x256xf32>
    %c0_126 = arith.constant 0 : index
    %c0_127 = arith.constant 0 : index
    %123 = vector.load %arg9[%c0_126, %c0_127] : memref<4x256xf32, #tpu.memory_space<vmem>>, vector<1x256xf32>
    %124 = vector.broadcast %123 : vector<1x256xf32> to vector<16x256xf32>
    %125 = arith.mulf %122, %124 : vector<16x256xf32>
    %c96_128 = arith.constant 96 : index
    %c0_129 = arith.constant 0 : index
    %126 = vector.load %arg12[%c96_128, %c0_129] : memref<145x256xf32, #tpu.memory_space<vmem>>, vector<16x256xf32>
    tpu.vector_store %arg12[%c96_128, %c0_129], %125 {strides = array<i32>} : memref<145x256xf32, #tpu.memory_space<vmem>>, vector<16x256xf32>,
    %c0_130 = arith.constant 0 : index
    %c50_131 = arith.constant 50 : index
    %127 = vector.load %arg11[%c0_130, %c50_131] : memref<16x324xf32, #tpu.memory_space<vmem>>, vector<16x256xf32>
    %c112_132 = arith.constant 112 : index
    %c0_133 = arith.constant 0 : index
    %128 = vector.load %arg12[%c112_132, %c0_133] : memref<145x256xf32, #tpu.memory_space<vmem>>, vector<16x256xf32>
    tpu.vector_store %arg12[%c112_132, %c0_133], %127 {strides = array<i32>} : memref<145x256xf32, #tpu.memory_space<vmem>>, vector<16x256xf32>,
    %c0_134 = arith.constant 0 : index
    %c51_135 = arith.constant 51 : index
    %129 = vector.load %arg11[%c0_134, %c51_135] : memref<16x324xf32, #tpu.memory_space<vmem>>, vector<16x256xf32>
    %c1_136 = arith.constant 1 : index
    %c0_137 = arith.constant 0 : index
    %130 = vector.load %arg9[%c1_136, %c0_137] : memref<4x256xf32, #tpu.memory_space<vmem>>, vector<1x256xf32>
    %131 = vector.broadcast %130 : vector<1x256xf32> to vector<16x256xf32>
    %132 = arith.mulf %129, %131 : vector<16x256xf32>
    %c128_138 = arith.constant 128 : index
    %c0_139 = arith.constant 0 : index
    %133 = vector.load %arg12[%c128_138, %c0_139] : memref<145x256xf32, #tpu.memory_space<vmem>>, vector<16x256xf32>
    tpu.vector_store %arg12[%c128_138, %c0_139], %132 {strides = array<i32>} : memref<145x256xf32, #tpu.memory_space<vmem>>, vector<16x256xf32>,
    %c0_140 = arith.constant 0 : index
    %c0_141 = arith.constant 0 : index
    %134 = vector.load %arg6[%c0_140, %c0_141] : memref<16x145xf32, #tpu.memory_space<vmem>>, vector<16x145xf32>
    %c0_142 = arith.constant 0 : index
    %c0_143 = arith.constant 0 : index
    %135 = vector.load %arg12[%c0_142, %c0_143] : memref<145x256xf32, #tpu.memory_space<vmem>>, vector<145x256xf32>
    %cst_144 = arith.constant dense<0.000000e+00> : vector<16x256xf32>
    %136 = tpu.matmul %134, %135, %cst_144 {dimension_numbers = #tpu.dot_dimension_numbers<[1], [0], [0], [1], [0, 0, 1, 1], [], []>} : vector<16x145xf32>, vector<145x256xf32>, vector<16x256xf32> -> vector<16x256xf32>
    %cst_145 = arith.constant 0.000000e+00 : f32
    %137 = vector.broadcast %cst_145 : f32 to vector<16x256xf32>
    %138 = arith.cmpf ogt, %136, %137 : vector<16x256xf32>
    %c0_146 = arith.constant 0 : index
    %c0_147 = arith.constant 0 : index
    %139 = vector.load %arg8[%c0_146, %c0_147] : memref<1x1xf32, #tpu.memory_space<vmem>>, vector<1x1xf32>
    %140 = vector.broadcast %139 : vector<1x1xf32> to vector<16x256xf32>
    %141 = arith.mulf %140, %136 : vector<16x256xf32>
    %142 = arith.select %138, %136, %141 : vector<16x256xi1>, vector<16x256xf32>
    %c0_148 = arith.constant 0 : index
    %c0_149 = arith.constant 0 : index
    %c0_150 = arith.constant 0 : index
    %143 = vector.load %arg10[%c0_148, %c0_149, %c0_150] : memref<1x16x256xf32, #tpu.memory_space<vmem>>, vector<1x16x256xf32>
    %144 = vector.shape_cast %143 : vector<1x16x256xf32> to vector<16x256xf32>
    %145 = vector.shape_cast %142 : vector<16x256xf32> to vector<1x16x256xf32>
    tpu.vector_store %arg10[%c0_148, %c0_149, %c0_150], %145 {strides = array<i32>} : memref<1x16x256xf32, #tpu.memory_space<vmem>>, vector<1x16x256xf32>,
    return
  }
  func.func @transform_0(%arg0: i32) -> (i32, i32, i32) {
    %c0_i32 = arith.constant 0 : i32
    %c0_i32_0 = arith.constant 0 : i32
    %c0_i32_1 = arith.constant 0 : i32
    return %arg0, %c0_i32, %c0_i32_0 : i32, i32, i32
  }
  func.func @transform_1(%arg0: i32) -> (i32, i32, i32) {
    %c0_i32 = arith.constant 0 : i32
    %c0_i32_0 = arith.constant 0 : i32
    %c0_i32_1 = arith.constant 0 : i32
    return %arg0, %c0_i32, %c0_i32_0 : i32, i32, i32
  }
  func.func @transform_2(%arg0: i32) -> (i32, i32) {
    %c0_i32 = arith.constant 0 : i32
    %c0_i32_0 = arith.constant 0 : i32
    %c0_i32_1 = arith.constant 0 : i32
    return %c0_i32, %c0_i32_0 : i32, i32
  }
  func.func @transform_3(%arg0: i32) -> (i32, i32) {
    %c0_i32 = arith.constant 0 : i32
    %c0_i32_0 = arith.constant 0 : i32
    %c0_i32_1 = arith.constant 0 : i32
    return %c0_i32, %c0_i32_0 : i32, i32
  }
  func.func @transform_4(%arg0: i32) -> (i32, i32) {
    %c0_i32 = arith.constant 0 : i32
    %c0_i32_0 = arith.constant 0 : i32
    %c0_i32_1 = arith.constant 0 : i32
    return %c0_i32, %c0_i32_0 : i32, i32
  }
  func.func @transform_5(%arg0: i32) -> (i32, i32) {
    %c0_i32 = arith.constant 0 : i32
    %c0_i32_0 = arith.constant 0 : i32
    %c0_i32_1 = arith.constant 0 : i32
    return %c0_i32, %c0_i32_0 : i32, i32
  }
  func.func @transform_6(%arg0: i32) -> (i32, i32) {
    %c0_i32 = arith.constant 0 : i32
    %c0_i32_0 = arith.constant 0 : i32
    %c0_i32_1 = arith.constant 0 : i32
    return %c0_i32, %c0_i32_0 : i32, i32
  }
  func.func @transform_7(%arg0: i32) -> (i32, i32) {
    %c0_i32 = arith.constant 0 : i32
    %c0_i32_0 = arith.constant 0 : i32
    %c0_i32_1 = arith.constant 0 : i32
    return %c0_i32, %c0_i32_0 : i32, i32
  }
  func.func @transform_8(%arg0: i32) -> (i32, i32) {
    %c0_i32 = arith.constant 0 : i32
    %c0_i32_0 = arith.constant 0 : i32
    %c0_i32_1 = arith.constant 0 : i32
    return %c0_i32, %c0_i32_0 : i32, i32
  }
  func.func @transform_9(%arg0: i32) -> (i32, i32, i32) {
    %c0_i32 = arith.constant 0 : i32
    %c0_i32_0 = arith.constant 0 : i32
    %c0_i32_1 = arith.constant 0 : i32
    return %arg0, %c0_i32, %c0_i32_0 : i32, i32, i32
  }
}

</mosaic_0001>

<llo_original>
// kernel: tpu_custom_call.1
$region0: #{tpu_custom_call.1}
  #allocation0 [shape = 'u32[]', space=smem, size = 0x4, offset = 0x4, fixed_abs, tag = 'smem constant byte address 0x4 - core index']
  #allocation1 [shape = 'u32[144,128]{1,0:T(1,128)}', space=vmem, size = 0x12000, scoped, tag = 'internal scratch']
  #allocation2 [shape = 'f32[16,324]{1,0:T(8,128)}', space=vmem, size = 0x6000, scoped, tag = 'scratch operand']
  #allocation3 [shape = 'f32[145,256]{1,0:T(8,128)}', space=vmem, size = 0x26000, scoped, tag = 'scratch operand']
  #allocation4 [shape = 'f32[1,1]{1,0:T(1,128)S(1)}', space=vmem, size = 0x200, scoped, tag = 'scoped memory for tpu_custom_call.1']
  %s0 = inlined_call_operand.hbm [shape: bf16[2,32,256], index: 0, kind: input, shape index: {}]
  %s1 = inlined_call_operand.hbm [shape: bf16[2,32,256], index: 1, kind: input, shape index: {}]
  %s2 = inlined_call_operand.vmem [shape: bf16[16,32], index: 2, kind: input, shape index: {}]
  %s3 = inlined_call_operand.vmem [shape: bf16[16,32], index: 3, kind: input, shape index: {}]
  %s4 = inlined_call_operand.hbm [shape: f32[16,145], index: 4, kind: input, shape index: {}]
  %s5 = inlined_call_operand.hbm [shape: f32[16,145], index: 5, kind: input, shape index: {}]
  %s6 = inlined_call_operand.vmem [shape: f32[16,1], index: 6, kind: input, shape index: {}]
  %s7 = inlined_call_operand.<no memory space> [shape: f32[1,1], index: 7, kind: input, shape index: {}]
  %s8 = inlined_call_operand.vmem [shape: f32[4,256], index: 8, kind: input, shape index: {}]
  %s9 = inlined_call_operand.hbm [shape: f32[2,16,256], index: 9, kind: output, shape index: {}]
  %s10 = sld [smem:[#allocation0]]
  $region85: #{tpu_custom_call.1} parent=0
    _
  %s12 = ssub.s32 1, %s10
  %s13 = scalar_select 0, %s12, %s10
  %v14 = vstv %s7
  %15 = vst [vmem:[#allocation4] sm:$0x1] %v14
  $region1: #{tpu_custom_call.1} parent=0
    #allocation5 [shape = 'u8[32768]{0}', space=vmem, size = 0x8000, scoped, tag = 'input window, operand 0']
    #allocation6 [shape = 's32[2]{0}', space=sflag, size = 0x8, scoped, tag = 'scoped memory for tpu_custom_call.1']
    #allocation7 [shape = 's32[2]{0}', space=sflag, size = 0x8, scoped, tag = 'scoped memory for tpu_custom_call.1']
    #allocation8 [shape = 'u8[32768]{0}', space=vmem, size = 0x8000, scoped, tag = 'input window, operand 1']
    #allocation9 [shape = 's32[2]{0}', space=sflag, size = 0x8, scoped, tag = 'scoped memory for tpu_custom_call.1']
    #allocation10 [shape = 'u8[16384]{0}', space=vmem, size = 0x4000, scoped, tag = 'input window, operand 4, single buffered']
    #allocation11 [shape = 'u8[16384]{0}', space=vmem, size = 0x4000, scoped, tag = 'input window, operand 5, single buffered']
    #allocation12 [shape = 's32[1]{0}', space=sflag, size = 0x4, scoped, tag = 'scoped memory for tpu_custom_call.1']
    #allocation13 [shape = 'u8[32768]{0}', space=vmem, size = 0x8000, scoped, tag = 'output window, operand 0']
    %16 = vsyncpa [#allocation6], 0
    %s17 = scalar_lea.sflag [#allocation6], 1
    %18 = vsyncpa %s17, 0
    %19 = vsyncpa [#allocation9], 0
    %s20 = scalar_lea.sflag [#allocation9], 1
    %21 = vsyncpa %s20, 0
    %22 = vsyncpa [#allocation12], 0
    %23 = vsyncpa [#allocation7], 0
    %s24 = scalar_lea.sflag [#allocation7], 1
    %25 = vsyncpa %s24, 0
    loop: start=0, step=1, limit=4
    $region2: #{tpu_custom_call.1} parent=1 // loop_pre_header
      _
    $region3: #{tpu_custom_call.1} parent=1 // loop_header
      %s27 = sphi 0, %s31
      %p28 = scmp.ge.s32.totalorder %s27, 4
      %s37 = sphi 0, %s39
      %s40 = sphi 0, %s37
      %s41 = sphi 0, %s40
      %s57 = sphi 0, %s41
      %s63 = sphi 0, %s65
      %s66 = sphi 0, %s63
      %s67 = sphi 0, %s66
      %s83 = sphi 0, %s67
      %s87 = sphi 0, %s87
      %s89 = sphi 0, %s87
      %s90 = sphi 0, %s89
      %s104 = sphi 0, %s90
      %s108 = sphi 0, %s108
      %s110 = sphi 0, %s108
      %s111 = sphi 0, %s110
      %s125 = sphi 0, %s111
      %s129 = sphi 0, %s129
      %s131 = sphi 0, %s129
      %s132 = sphi 0, %s131
      %s146 = sphi 0, %s132
      %s150 = sphi 0, %s150
      %s152 = sphi 0, %s150
      %s153 = sphi 0, %s152
      %s167 = sphi 0, %s153
      %s171 = sphi 0, %s171
      %s173 = sphi 0, %s171
      %s174 = sphi 0, %s173
      %s188 = sphi 0, %s174
      %s192 = sphi 0, %s192
      %s194 = sphi 0, %s192
      %s195 = sphi 0, %s194
      %s209 = sphi 0, %s195
      %s213 = sphi 0, %s213
      %s215 = sphi 0, %s213
      %s216 = sphi 0, %s215
      %s230 = sphi 0, %s216
      %s236 = sphi 0, %s238
      %s239 = sphi 0, %s236
      %s240 = sphi 0, %s239
      %s256 = sphi 0, %s240
    $region4: #{tpu_custom_call.1} parent=1 // loop_header_branch
      %30 = sbr.rel (%p28) target = $region8
    $region5: #{tpu_custom_call.1} parent=1 // loop_body
      %s32 = ssub.s32 %s27, 1
      %s33 = ssub.s32 %s27, 2
      %s34 = sadd.s32 %s27, 1
      %s35 = ssub.s32 %s27, %s34
      %p36 = scmp.eq.s32.totalorder %s35, 0
      %s38 = sadd.s32 %s37, 1
      %s39 = scalar_select %p36, %s37, %s38
      %p42 = pneg %p36
      %p43 = scmp.eq.s32.totalorder %s27, 1
      %p44 = por %p42, %p43
      %p45 = scmp.ne.s32.totalorder %s37, %s40
      %p46 = scmp.eq.s32.totalorder %s27, 0
      %p47 = por %p45, %p46
      %p48 = scmp.ne.s32.totalorder %s37, %s40
      %p49 = scmp.eq.s32.totalorder %s32, 1
      %p50 = por %p48, %p49
      %p51 = scmp.ne.s32.totalorder %s40, %s41
      %p52 = scmp.eq.s32.totalorder %s32, 0
      %p53 = por %p51, %p52
      %p54 = scmp.ne.s32.totalorder %s40, %s41
      %p55 = scmp.eq.s32.totalorder %s33, 1
      %p56 = por %p54, %p55
      %p58 = scmp.ne.s32.totalorder %s41, %s57
      %p59 = scmp.eq.s32.totalorder %s33, 0
      %p60 = por %p58, %p59
      %s61 = ssub.s32 %s27, %s34
      %p62 = scmp.eq.s32.totalorder %s61, 0
      %s64 = sadd.s32 %s63, 1
      %s65 = scalar_select %p62, %s63, %s64
      %p68 = pneg %p62
      %p69 = scmp.eq.s32.totalorder %s27, 1
      %p70 = por %p68, %p69
      %p71 = scmp.ne.s32.totalorder %s63, %s66
      %p72 = scmp.eq.s32.totalorder %s27, 0
      %p73 = por %p71, %p72
      %p74 = scmp.ne.s32.totalorder %s63, %s66
      %p75 = scmp.eq.s32.totalorder %s32, 1
      %p76 = por %p74, %p75
      %p77 = scmp.ne.s32.totalorder %s66, %s67
      %p78 = scmp.eq.s32.totalorder %s32, 0
      %p79 = por %p77, %p78
      %p80 = scmp.ne.s32.totalorder %s66, %s67
      %p81 = scmp.eq.s32.totalorder %s33, 1
      %p82 = por %p80, %p81
      %p84 = scmp.ne.s32.totalorder %s67, %s83
      %p85 = scmp.eq.s32.totalorder %s33, 0
      %p86 = por %p84, %p85
      %s88 = sadd.s32 %s87, 1
      %p91 = scmp.eq.s32.totalorder %s27, 1
      %p92 = scmp.ne.s32.totalorder %s87, %s89
      %p93 = scmp.eq.s32.totalorder %s27, 0
      %p94 = por %p92, %p93
      %p95 = scmp.ne.s32.totalorder %s87, %s89
      %p96 = scmp.eq.s32.totalorder %s32, 1
      %p97 = por %p95, %p96
      %p98 = scmp.ne.s32.totalorder %s89, %s90
      %p99 = scmp.eq.s32.totalorder %s32, 0
      %p100 = por %p98, %p99
      %p101 = scmp.ne.s32.totalorder %s89, %s90
      %p102 = scmp.eq.s32.totalorder %s33, 1
      %p103 = por %p101, %p102
      %p105 = scmp.ne.s32.totalorder %s90, %s104
      %p106 = scmp.eq.s32.totalorder %s33, 0
      %p107 = por %p105, %p106
      %s109 = sadd.s32 %s108, 1
      %p112 = scmp.eq.s32.totalorder %s27, 1
      %p113 = scmp.ne.s32.totalorder %s108, %s110
      %p114 = scmp.eq.s32.totalorder %s27, 0
      %p115 = por %p113, %p114
      %p116 = scmp.ne.s32.totalorder %s108, %s110
      %p117 = scmp.eq.s32.totalorder %s32, 1
      %p118 = por %p116, %p117
      %p119 = scmp.ne.s32.totalorder %s110, %s111
      %p120 = scmp.eq.s32.totalorder %s32, 0
      %p121 = por %p119, %p120
      %p122 = scmp.ne.s32.totalorder %s110, %s111
      %p123 = scmp.eq.s32.totalorder %s33, 1
      %p124 = por %p122, %p123
      %p126 = scmp.ne.s32.totalorder %s111, %s125
      %p127 = scmp.eq.s32.totalorder %s33, 0
      %p128 = por %p126, %p127
      %s130 = sadd.s32 %s129, 1
      %p133 = scmp.eq.s32.totalorder %s27, 1
      %p134 = scmp.ne.s32.totalorder %s129, %s131
      %p135 = scmp.eq.s32.totalorder %s27, 0
      %p136 = por %p134, %p135
      %p137 = scmp.ne.s32.totalorder %s129, %s131
      %p138 = scmp.eq.s32.totalorder %s32, 1
      %p139 = por %p137, %p138
      %p140 = scmp.ne.s32.totalorder %s131, %s132
      %p141 = scmp.eq.s32.totalorder %s32, 0
      %p142 = por %p140, %p141
      %p143 = scmp.ne.s32.totalorder %s131, %s132
      %p144 = scmp.eq.s32.totalorder %s33, 1
      %p145 = por %p143, %p144
      %p147 = scmp.ne.s32.totalorder %s132, %s146
      %p148 = scmp.eq.s32.totalorder %s33, 0
      %p149 = por %p147, %p148
      %s151 = sadd.s32 %s150, 1
      %p154 = scmp.eq.s32.totalorder %s27, 1
      %p155 = scmp.ne.s32.totalorder %s150, %s152
      %p156 = scmp.eq.s32.totalorder %s27, 0
      %p157 = por %p155, %p156
      %p158 = scmp.ne.s32.totalorder %s150, %s152
      %p159 = scmp.eq.s32.totalorder %s32, 1
      %p160 = por %p158, %p159
      %p161 = scmp.ne.s32.totalorder %s152, %s153
      %p162 = scmp.eq.s32.totalorder %s32, 0
      %p163 = por %p161, %p162
      %p164 = scmp.ne.s32.totalorder %s152, %s153
      %p165 = scmp.eq.s32.totalorder %s33, 1
      %p166 = por %p164, %p165
      %p168 = scmp.ne.s32.totalorder %s153, %s167
      %p169 = scmp.eq.s32.totalorder %s33, 0
      %p170 = por %p168, %p169
      %s172 = sadd.s32 %s171, 1
      %p175 = scmp.eq.s32.totalorder %s27, 1
      %p176 = scmp.ne.s32.totalorder %s171, %s173
      %p177 = scmp.eq.s32.totalorder %s27, 0
      %p178 = por %p176, %p177
      %p179 = scmp.ne.s32.totalorder %s171, %s173
      %p180 = scmp.eq.s32.totalorder %s32, 1
      %p181 = por %p179, %p180
      %p182 = scmp.ne.s32.totalorder %s173, %s174
      %p183 = scmp.eq.s32.totalorder %s32, 0
      %p184 = por %p182, %p183
      %p185 = scmp.ne.s32.totalorder %s173, %s174
      %p186 = scmp.eq.s32.totalorder %s33, 1
      %p187 = por %p185, %p186
      %p189 = scmp.ne.s32.totalorder %s174, %s188
      %p190 = scmp.eq.s32.totalorder %s33, 0
      %p191 = por %p189, %p190
      %s193 = sadd.s32 %s192, 1
      %p196 = scmp.eq.s32.totalorder %s27, 1
      %p197 = scmp.ne.s32.totalorder %s192, %s194
      %p198 = scmp.eq.s32.totalorder %s27, 0
      %p199 = por %p197, %p198
      %p200 = scmp.ne.s32.totalorder %s192, %s194
      %p201 = scmp.eq.s32.totalorder %s32, 1
      %p202 = por %p200, %p201
      %p203 = scmp.ne.s32.totalorder %s194, %s195
      %p204 = scmp.eq.s32.totalorder %s32, 0
      %p205 = por %p203, %p204
      %p206 = scmp.ne.s32.totalorder %s194, %s195
      %p207 = scmp.eq.s32.totalorder %s33, 1
      %p208 = por %p206, %p207
      %p210 = scmp.ne.s32.totalorder %s195, %s209
      %p211 = scmp.eq.s32.totalorder %s33, 0
      %p212 = por %p210, %p211
      %s214 = sadd.s32 %s213, 1
      %p217 = scmp.eq.s32.totalorder %s27, 1
      %p218 = scmp.ne.s32.totalorder %s213, %s215
      %p219 = scmp.eq.s32.totalorder %s27, 0
      %p220 = por %p218, %p219
      %p221 = scmp.ne.s32.totalorder %s213, %s215
      %p222 = scmp.eq.s32.totalorder %s32, 1
      %p223 = por %p221, %p222
      %p224 = scmp.ne.s32.totalorder %s215, %s216
      %p225 = scmp.eq.s32.totalorder %s32, 0
      %p226 = por %p224, %p225
      %p227 = scmp.ne.s32.totalorder %s215, %s216
      %p228 = scmp.eq.s32.totalorder %s33, 1
      %p229 = por %p227, %p228
      %p231 = scmp.ne.s32.totalorder %s216, %s230
      %p232 = scmp.eq.s32.totalorder %s33, 0
      %p233 = por %p231, %p232
      %s234 = ssub.s32 %s27, %s34
      %p235 = scmp.eq.s32.totalorder %s234, 0
      %s237 = sadd.s32 %s236, 1
      %s238 = scalar_select %p235, %s236, %s237
      %p241 = pneg %p235
      %p242 = scmp.eq.s32.totalorder %s27, 1
      %p243 = por %p241, %p242
      %p244 = scmp.ne.s32.totalorder %s236, %s239
      %p245 = scmp.eq.s32.totalorder %s27, 0
      %p246 = por %p244, %p245
      %p247 = scmp.ne.s32.totalorder %s236, %s239
      %p248 = scmp.eq.s32.totalorder %s32, 1
      %p249 = por %p247, %p248
      %p250 = scmp.ne.s32.totalorder %s239, %s240
      %p251 = scmp.eq.s32.totalorder %s32, 0
      %p252 = por %p250, %p251
      %p253 = scmp.ne.s32.totalorder %s239, %s240
      %p254 = scmp.eq.s32.totalorder %s33, 1
      %p255 = por %p253, %p254
      %p257 = scmp.ne.s32.totalorder %s240, %s256
      %p258 = scmp.eq.s32.totalorder %s33, 0
      %p259 = por %p257, %p258
      %p260 = scmp.le.s32.totalorder 1, %s27
      %p261 = scmp.lt.s32.totalorder %s27, 3
      %p262 = pnand %p260, %p261
      %p263 = pneg %p262
      // Predicated region
      $region9: #{tpu_custom_call.1} parent=5 // pred_check
        _
      $region10: #{tpu_custom_call.1} parent=5 // pred_check_branch
        %265 = sbr.rel (%p262) target = $region12
      $region11: #{tpu_custom_call.1} parent=5 // pred_region
        %s266 = ssub.s32 %s27, 1
        // Predicated region
        $region13: #{tpu_custom_call.1} parent=11 // pred_check
          %p267 = pneg %p100
        $region14: #{tpu_custom_call.1} parent=11 // pred_check_branch
          %269 = sbr.rel (%p267) target = $region16
        $region15: #{tpu_custom_call.1} parent=11 // pred_region
          _
        $region16: #{tpu_custom_call.1} parent=11 // pred_fallthru
          _
        // Predicated region
        $region17: #{tpu_custom_call.1} parent=11 // pred_check
          %p270 = pneg %p121
        $region18: #{tpu_custom_call.1} parent=11 // pred_check_branch
          %272 = sbr.rel (%p270) target = $region20
        $region19: #{tpu_custom_call.1} parent=11 // pred_region
          _
        $region20: #{tpu_custom_call.1} parent=11 // pred_fallthru
          _
        // Predicated region
        $region21: #{tpu_custom_call.1} parent=11 // pred_check
          %p273 = pneg %p142
        $region22: #{tpu_custom_call.1} parent=11 // pred_check_branch
          %275 = sbr.rel (%p273) target = $region24
        $region23: #{tpu_custom_call.1} parent=11 // pred_region
          %s277 = ssub.s32 512, 512
          %278 = vsyncadd [#allocation9], %s277
          %s279 = sshll.u32 [#allocation10], 4
          %s280 = int_to_ptr.vmem [resolvable:$true] %s279
          %285 = dma.hbm_to_vmem [thread:$0]  %s4, 512, %s280, [#allocation9], 256, 256, 16
        $region24: #{tpu_custom_call.1} parent=11 // pred_fallthru
          _
        // Predicated region
        $region25: #{tpu_custom_call.1} parent=11 // pred_check
          %p286 = pneg %p163
        $region26: #{tpu_custom_call.1} parent=11 // pred_check_branch
          %288 = sbr.rel (%p286) target = $region28
        $region27: #{tpu_custom_call.1} parent=11 // pred_region
          %s290 = ssub.s32 512, 512
          %291 = vsyncadd [#allocation12], %s290
          %s292 = sshll.u32 [#allocation11], 4
          %s293 = int_to_ptr.vmem [resolvable:$true] %s292
          %298 = dma.hbm_to_vmem [thread:$0]  %s5, 512, %s293, [#allocation12], 256, 256, 16
        $region28: #{tpu_custom_call.1} parent=11 // pred_fallthru
          _
        // Predicated region
        $region29: #{tpu_custom_call.1} parent=11 // pred_check
          %p299 = pneg %p184
        $region30: #{tpu_custom_call.1} parent=11 // pred_check_branch
          %301 = sbr.rel (%p299) target = $region32
        $region31: #{tpu_custom_call.1} parent=11 // pred_region
          _
        $region32: #{tpu_custom_call.1} parent=11 // pred_fallthru
          _
        // Predicated region
        $region33: #{tpu_custom_call.1} parent=11 // pred_check
          %p302 = pneg %p205
        $region34: #{tpu_custom_call.1} parent=11 // pred_check_branch
          %304 = sbr.rel (%p302) target = $region36
        $region35: #{tpu_custom_call.1} parent=11 // pred_region
          _
        $region36: #{tpu_custom_call.1} parent=11 // pred_fallthru
          _
        // Predicated region
        $region37: #{tpu_custom_call.1} parent=11 // pred_check
          %p305 = pneg %p226
        $region38: #{tpu_custom_call.1} parent=11 // pred_check_branch
          %307 = sbr.rel (%p305) target = $region40
        $region39: #{tpu_custom_call.1} parent=11 // pred_region
          _
        $region40: #{tpu_custom_call.1} parent=11 // pred_fallthru
          _
      $region12: #{tpu_custom_call.1} parent=5 // pred_fallthru
        _
      %p308 = scmp.lt.s32.totalorder %s27, 2
      // Predicated region
      $region41: #{tpu_custom_call.1} parent=5 // pred_check
        %p309 = pneg %p308
      $region42: #{tpu_custom_call.1} parent=5 // pred_check_branch
        %311 = sbr.rel (%p309) target = $region44
      $region43: #{tpu_custom_call.1} parent=5 // pred_region
        // Predicated region
        $region45: #{tpu_custom_call.1} parent=43 // pred_check
          %p312 = pneg %p47
        $region46: #{tpu_custom_call.1} parent=43 // pred_check_branch
          %314 = sbr.rel (%p312) target = $region48
        $region47: #{tpu_custom_call.1} parent=43 // pred_region
          %s315 = sand.u32 %s37, 1
          %s316 = scalar_lea.sflag [#allocation6], %s315
          %s317 = sand.u32 %s37, 1
          %s318 = smul.addr %s317, 32
          %s319 = scalar_lea.vmem [#allocation5], %s318
          %s321 = ssub.s32 512, 512
          %322 = vsyncadd %s316, %s321
          %s323 = smul.addr %s27, 8
          %s324 = smul.addr %s323, 64
          %s325 = scalar_lea.hbm %s0, %s324
          %s326 = sshll.u32 %s319, 4
          %s327 = int_to_ptr.vmem [resolvable:$true] %s326
          %332 = dma.hbm_to_vmem [thread:$0]  %s325, 512, %s327, %s316, 128, 128, 8
        $region48: #{tpu_custom_call.1} parent=43 // pred_fallthru
          _
        // Predicated region
        $region49: #{tpu_custom_call.1} parent=43 // pred_check
          %p333 = pneg %p73
        $region50: #{tpu_custom_call.1} parent=43 // pred_check_branch
          %335 = sbr.rel (%p333) target = $region52
        $region51: #{tpu_custom_call.1} parent=43 // pred_region
          %s336 = sand.u32 %s27, 1
          %s337 = scalar_lea.sflag [#allocation9], %s336
          %s338 = sand.u32 %s63, 1
          %s339 = smul.addr %s338, 32
          %s340 = scalar_lea.vmem [#allocation8], %s339
          %s342 = ssub.s32 512, 512
          %343 = vsyncadd %s337, %s342
          %s344 = smul.addr %s27, 8
          %s345 = smul.addr %s344, 64
          %s346 = scalar_lea.hbm %s1, %s345
          %s347 = sshll.u32 %s340, 4
          %s348 = int_to_ptr.vmem [resolvable:$true] %s347
          %353 = dma.hbm_to_vmem [thread:$0]  %s346, 512, %s348, %s337, 128, 128, 8
        $region52: #{tpu_custom_call.1} parent=43 // pred_fallthru
          _
      $region44: #{tpu_custom_call.1} parent=5 // pred_fallthru
        _
      %p354 = scmp.le.s32.totalorder 1, %s27
      %p355 = scmp.lt.s32.totalorder %s27, 3
      %p356 = pnand %p354, %p355
      %p357 = pneg %p356
      // Predicated region
      $region53: #{tpu_custom_call.1} parent=5 // pred_check
        _
      $region54: #{tpu_custom_call.1} parent=5 // pred_check_branch
        %359 = sbr.rel (%p356) target = $region56
      $region55: #{tpu_custom_call.1} parent=5 // pred_region
        %s360 = ssub.s32 %s27, 1
        %s361 = sand.u32 %s40, 1
        %s362 = scalar_lea.sflag [#allocation6], %s361
        %s363 = sand.u32 %s40, 1
        %s364 = smul.addr %s363, 32
        %s365 = scalar_lea.vmem [#allocation5], %s364
        // Predicated region
        $region57: #{tpu_custom_call.1} parent=55 // pred_check
          %p366 = pneg %p53
        $region58: #{tpu_custom_call.1} parent=55 // pred_check_branch
          %368 = sbr.rel (%p366) target = $region60
        $region59: #{tpu_custom_call.1} parent=55 // pred_region
          %369 = dma.done %s362, 512
        $region60: #{tpu_custom_call.1} parent=55 // pred_fallthru
          _
        %s370 = sand.u32 %s32, 1
        %s371 = scalar_lea.sflag [#allocation9], %s370
        %s372 = sand.u32 %s66, 1
        %s373 = smul.addr %s372, 32
        %s374 = scalar_lea.vmem [#allocation8], %s373
        // Predicated region
        $region61: #{tpu_custom_call.1} parent=55 // pred_check
          %p375 = pneg %p79
        $region62: #{tpu_custom_call.1} parent=55 // pred_check_branch
          %377 = sbr.rel (%p375) target = $region64
        $region63: #{tpu_custom_call.1} parent=55 // pred_region
          %378 = dma.done %s371, 512
        $region64: #{tpu_custom_call.1} parent=55 // pred_fallthru
          _
        // Predicated region
        $region65: #{tpu_custom_call.1} parent=55 // pred_check
          %p379 = pneg %p142
        $region66: #{tpu_custom_call.1} parent=55 // pred_check_branch
          %381 = sbr.rel (%p379) target = $region68
        $region67: #{tpu_custom_call.1} parent=55 // pred_region
          %382 = dma.done [#allocation9], 512
        $region68: #{tpu_custom_call.1} parent=55 // pred_fallthru
          _
        // Predicated region
        $region69: #{tpu_custom_call.1} parent=55 // pred_check
          %p383 = pneg %p163
        $region70: #{tpu_custom_call.1} parent=55 // pred_check_branch
          %385 = sbr.rel (%p383) target = $region72
        $region71: #{tpu_custom_call.1} parent=55 // pred_region
          %386 = dma.done [#allocation12], 512
        $region72: #{tpu_custom_call.1} parent=55 // pred_fallthru
          _
        %s387 = sand.u32 %s40, 1
        %s388 = scalar_lea.sflag [#allocation6], %s387
        %s389 = sand.u32 %s40, 1
        %s390 = smul.addr %s389, 32
        %s391 = scalar_lea.vmem [#allocation5], %s390
        %p392 = pneg %p53
        %p393 = pneg %p50
        %s394 = sand.u32 %s32, 1
        %s395 = scalar_lea.sflag [#allocation9], %s394
        %s396 = sand.u32 %s66, 1
        %s397 = smul.addr %s396, 32
        %s398 = scalar_lea.vmem [#allocation8], %s397
        %p399 = pneg %p79
        %p400 = pneg %p76
        %p401 = pneg %p100
        %p402 = pneg %p97
        %p403 = pneg %p121
        %p404 = pneg %p118
        %p405 = pneg %p142
        %p406 = pneg %p139
        %p407 = pneg %p163
        %p408 = pneg %p160
        %p409 = pneg %p184
        %p410 = pneg %p181
        %p411 = pneg %p205
        %p412 = pneg %p202
        %p413 = pneg %p226
        %p414 = pneg %p223
        %p415 = pneg %p252
        %p416 = pneg %p249
        %s417 = sand.u32 %s239, 1
        %s418 = scalar_lea.sflag [#allocation7], %s417
        %s419 = sand.u32 %s239, 1
        %s420 = smul.addr %s419, 32
        %s421 = scalar_lea.vmem [#allocation13], %s420
        %v423 = vld [vmem:[%s2] sm:$0xf]
        %v424 = vld [vmem:[%s2 + $0x4] sm:$0xf]
        %v425 = vld [vmem:[%s365] sm:$0xff]
        %v426 = vld [vmem:[%s365 + $0x8] sm:$0xff]
        %v427 = vld [vmem:[%s365 + $0x10] sm:$0xff]
        %v428 = vld [vmem:[%s365 + $0x18] sm:$0xff]
        %v431 = vunpack.c.l.b16 %v423
        %v432 = vunpack.c.l.b16 %v424
        %v433 = vpack.c.b16 %v432, %v431
        %v438 = vunpack.c.l.b16 %v425
        %v439 = vunpack.c.h.b16 %v425
        %v440 = vunpack.c.l.b16 %v426
        %v441 = vunpack.c.h.b16 %v426
        %v442 = vunpack.c.l.b16 %v427
        %v443 = vunpack.c.h.b16 %v427
        %v444 = vunpack.c.l.b16 %v428
        %v445 = vunpack.c.h.b16 %v428
        %v446 = vpack.c.b16 %v440, %v438
        %v447 = vpack.c.b16 %v441, %v439
        %v448 = vpack.c.b16 %v444, %v442
        %v449 = vpack.c.b16 %v445, %v443
        %vm454 = vcmask 261120
        %v456 = vsel %vm454, %v433, 0
        %458 = vmatprep.subr.bf16.mxu0 0
        %459 = vmatpush1.bf16.msra.mxu0 0
        %460 = vmatprep.subr.bf16.mxu0 0
        %461 = vmatpush1.bf16.msra.mxu0 0
        %462 = vmatprep.subr.bf16.mxu0 0
        %463 = vmatpush1.bf16.msra.mxu0 0
        %464 = vmatprep.subr.bf16.mxu0 0
        %465 = vmatpush1.bf16.msra.mxu0 0
        %466 = vmatprep.subr.bf16.mxu0 0
        %467 = vmatpush1.bf16.msra.mxu0 0
        %468 = vmatprep.subr.bf16.mxu0 0
        %469 = vmatpush1.bf16.msra.mxu0 0
        %470 = vmatprep.subr.bf16.mxu0 %v449
        %471 = vmatpush1.bf16.msra.mxu0 %v448
        %472 = vmatprep.subr.bf16.mxu0 %v447
        %473 = vmatpush1.bf16.msra.mxu0 %v446
        %474 = vmatprep.subr.bf16.mxu0 0
        %475 = vmatpush2.bf16.msra.mxu0 0
        %476 = vmatprep.subr.bf16.mxu0 0
        %477 = vmatpush2.bf16.msra.mxu0 0
        %478 = vmatprep.subr.bf16.mxu0 0
        %479 = vmatpush2.bf16.msra.mxu0 0
        %480 = vmatprep.subr.bf16.mxu0 0
        %481 = vmatpush2.bf16.msra.mxu0 0
        %482 = vmatprep.subr.bf16.mxu0 0
        %483 = vmatpush2.bf16.msra.mxu0 0
        %484 = vmatprep.subr.bf16.mxu0 0
        %485 = vmatpush2.bf16.msra.mxu0 0
        %486 = vmatprep.subr.bf16.mxu0 0
        %487 = vmatpush2.bf16.msra.mxu0 0
        %488 = vmatprep.subr.bf16.mxu0 0
        %489 = vmatpush2.bf16.msra.mxu0 0
        %490 = vmatprep.mubr.bf16.mxu0 0
        %491 = vmatmul.mubr.bf16.gmra.mxu0 %v456
        %v492 = vpop.f32.mrf.mxu0
        %v493 = vadd.f32 0.0, %v492
        %v494 = vpop.f32.mrf.mxu0
        %v495 = vadd.f32 0.0, %v494
        %v496 = vpop.f32.mrf.mxu0
        %v497 = vadd.f32 0.0, %v496
        %v498 = vpop.f32.mrf.mxu0
        %v499 = vadd.f32 0.0, %v498
        %500 = vdwg.mxu0
        %vm501 = vcmask 277504
        %502 = vst.msk [vmem:[#allocation2] sm:$0xff] %vm501, 0.0
        %503 = vst.msk [vmem:[#allocation2 + $0x18] sm:$0xff] %vm501, 0.0
        %vm504 = vcmask 556304
        %505 = vst.msk [vmem:[#allocation2 + $0x10] sm:$0xff] %vm504, 0.0
        %506 = vst.msk [vmem:[#allocation2 + $0x28] sm:$0xff] %vm504, 0.0
        %511 = vrot.lane.b32.xlu0 %v493, 34
        %v512 = vpop.permute.xlu0 %511
        %513 = vrot.lane.b32.xlu0 %v495, 34
        %v514 = vpop.permute.xlu0 %513
        %515 = vrot.lane.b32.xlu0 %v497, 34
        %v516 = vpop.permute.xlu0 %515
        %517 = vrot.lane.b32.xlu0 %v499, 34
        %v518 = vpop.permute.xlu0 %517
        %v519 = vsel %vm501, %v512, %v514
        %v520 = vsel %vm501, %v516, %v518
        %vm527 = vcmask 1047824
        %528 = vst.msk [vmem:[#allocation2] sm:$0xff] %vm527, %v512
        %529 = vst [vmem:[#allocation2 + $0x8] sm:$0xff] %v519
        %530 = vst.msk [vmem:[#allocation2 + $0x10] sm:$0xff] %vm501, %v514
        %531 = vst.msk [vmem:[#allocation2 + $0x18] sm:$0xff] %vm527, %v516
        %532 = vst [vmem:[#allocation2 + $0x20] sm:$0xff] %v520
        %533 = vst.msk [vmem:[#allocation2 + $0x28] sm:$0xff] %vm501, %v518
        %v534 = vlaneseq
        %vm535 = vcmp.ge.s32.totalorder %v534, 0
        %vm536 = vcmp.lt.s32.totalorder %v534, 256
        %vm537 = vmand %vm535, %vm536
        %s538 = scalar_lea.vmem [#allocation3], 288
        %539 = vst.msk [vmem:[%s538] ss:$8 sm:$0x3] %vm537, 1.0
        %540 = vst.msk [vmem:[%s538] ss:$8 sm:$0x0] %vm537, 1.0
        %v541 = vld [vmem:[#allocation2] sm:$0xff]
        %v542 = vld [vmem:[#allocation2 + $0x8] sm:$0xff]
        %v543 = vld [vmem:[#allocation2 + $0x10] sm:$0xff]
        %v544 = vld [vmem:[%s8] ss:$4 sm:$0x3]
        %v546 = vlaneseq
        %v547 = vshrl.u32 %v546, 7
        %v548 = vsub.s32 0, %v547
        %v549 = vrot.slane %v544, %v548
        %v550 = vlaneseq
        %v551 = vshrl.u32 %v550, 7
        %v552 = vsub.s32 1, %v551
        %v553 = vrot.slane %v544, %v552
        %554 = vrot.lane.b32.xlu0 %v549, 17
        %v555 = vpop.permute.xlu0 %554
        %556 = vrot.lane.b32.xlu0 %v553, 17
        %v557 = vpop.permute.xlu0 %556
        %vm558 = vcmask 138240
        %v559 = vsel %vm558, %v555, %v557
        %v563 = vmul.f32 %v541, %v555
        %v564 = vmul.f32 %v542, %v559
        %v565 = vmul.f32 %v543, %v557
        %569 = vrot.lane.b32.xlu0 %v563, 111
        %v570 = vpop.permute.xlu0 %569
        %571 = vrot.lane.b32.xlu0 %v564, 111
        %v572 = vpop.permute.xlu0 %571
        %573 = vrot.lane.b32.xlu0 %v565, 111
        %v574 = vpop.permute.xlu0 %573
        %vm575 = vcmask 908288
        %v576 = vsel %vm575, %v570, %v572
        %v577 = vsel %vm575, %v572, %v574
        %580 = vst [vmem:[#allocation3] sm:$0xff] %v576
        %581 = vst [vmem:[#allocation3 + $0x8] sm:$0xff] %v577
        %v582 = vld [vmem:[#allocation2 + $0x18] sm:$0xff]
        %v583 = vld [vmem:[#allocation2 + $0x20] sm:$0xff]
        %s584 = scalar_lea.vmem %s8, 2
        %v585 = vld [vmem:[%s584] ss:$4 sm:$0x3]
        %v587 = vlaneseq
        %v588 = vshrl.u32 %v587, 7
        %v589 = vsub.s32 0, %v588
        %v590 = vrot.slane %v585, %v589
        %v591 = vlaneseq
        %v592 = vshrl.u32 %v591, 7
        %v593 = vsub.s32 1, %v592
        %v594 = vrot.slane %v585, %v593
        %v597 = vmul.f32 %v582, %v590
        %v598 = vmul.f32 %v583, %v594
        %599 = vst [vmem:[#allocation3 + $0x90] sm:$0xff] %v597
        %600 = vst [vmem:[#allocation3 + $0x98] sm:$0xff] %v598
        %v601 = vld [vmem:[#allocation2] sm:$0xff]
        %v602 = vld [vmem:[#allocation2 + $0x8] sm:$0xff]
        %v603 = vld [vmem:[#allocation2 + $0x10] sm:$0xff]
        %607 = vrot.lane.b32.xlu0 %v601, 110
        %v608 = vpop.permute.xlu0 %607
        %609 = vrot.lane.b32.xlu0 %v602, 110
        %v610 = vpop.permute.xlu0 %609
        %611 = vrot.lane.b32.xlu0 %v603, 110
        %v612 = vpop.permute.xlu0 %611
        %vm613 = vcmask 900096
        %v614 = vsel %vm613, %v608, %v610
        %v615 = vsel %vm613, %v610, %v612
        %618 = vst [vmem:[#allocation3 + $0x10] sm:$0xff] %v614
        %619 = vst [vmem:[#allocation3 + $0x18] sm:$0xff] %v615
        %v620 = vld [vmem:[#allocation2 + $0x18] sm:$0xff]
        %v621 = vld [vmem:[#allocation2 + $0x20] sm:$0xff]
        %v622 = vld [vmem:[#allocation2 + $0x28] sm:$0xff]
        %626 = vrot.lane.b32.xlu0 %v620, 126
        %v627 = vpop.permute.xlu0 %626
        %628 = vrot.lane.b32.xlu0 %v621, 126
        %v629 = vpop.permute.xlu0 %628
        %630 = vrot.lane.b32.xlu0 %v622, 126
        %v631 = vpop.permute.xlu0 %630
        %vm632 = vcmask 1031168
        %v633 = vsel %vm632, %v627, %v629
        %v634 = vsel %vm632, %v629, %v631
        %637 = vst [vmem:[#allocation3 + $0xa0] sm:$0xff] %v633
        %638 = vst [vmem:[#allocation3 + $0xa8] sm:$0xff] %v634
        %v639 = vld [vmem:[#allocation2] sm:$0xff]
        %v640 = vld [vmem:[#allocation2 + $0x8] sm:$0xff]
        %v641 = vld [vmem:[#allocation2 + $0x10] sm:$0xff]
        %s642 = scalar_lea.vmem %s8, 1
        %v643 = vld [vmem:[%s642] ss:$4 sm:$0x3]
        %v645 = vlaneseq
        %v646 = vshrl.u32 %v645, 7
        %v647 = vsub.s32 0, %v646
        %v648 = vrot.slane %v643, %v647
        %v649 = vlaneseq
        %v650 = vshrl.u32 %v649, 7
        %v651 = vsub.s32 1, %v650
        %v652 = vrot.slane %v643, %v651
        %653 = vrot.lane.b32.xlu0 %v648, 19
        %v654 = vpop.permute.xlu0 %653
        %655 = vrot.lane.b32.xlu0 %v652, 19
        %v656 = vpop.permute.xlu0 %655
        %vm657 = vcmask 154624
        %v658 = vsel %vm657, %v654, %v656
        %v662 = vmul.f32 %v639, %v654
        %v663 = vmul.f32 %v640, %v658
        %v664 = vmul.f32 %v641, %v656
        %668 = vrot.lane.b32.xlu0 %v662, 109
        %v669 = vpop.permute.xlu0 %668
        %670 = vrot.lane.b32.xlu0 %v663, 109
        %v671 = vpop.permute.xlu0 %670
        %672 = vrot.lane.b32.xlu0 %v664, 109
        %v673 = vpop.permute.xlu0 %672
        %vm674 = vcmask 891904
        %v675 = vsel %vm674, %v669, %v671
        %v676 = vsel %vm674, %v671, %v673
        %679 = vst [vmem:[#allocation3 + $0x20] sm:$0xff] %v675
        %680 = vst [vmem:[#allocation3 + $0x28] sm:$0xff] %v676
        %v681 = vld [vmem:[#allocation2 + $0x18] sm:$0xff]
        %v682 = vld [vmem:[#allocation2 + $0x20] sm:$0xff]
        %v683 = vld [vmem:[#allocation2 + $0x28] sm:$0xff]
        %s684 = scalar_lea.vmem %s8, 3
        %v685 = vld [vmem:[%s684] ss:$4 sm:$0x3]
        %v687 = vlaneseq
        %v688 = vshrl.u32 %v687, 7
        %v689 = vsub.s32 0, %v688
        %v690 = vrot.slane %v685, %v689
        %v691 = vlaneseq
        %v692 = vshrl.u32 %v691, 7
        %v693 = vsub.s32 1, %v692
        %v694 = vrot.slane %v685, %v693
        %695 = vrot.lane.b32.xlu0 %v690, 4
        %v696 = vpop.permute.xlu0 %695
        %697 = vrot.lane.b32.xlu0 %v694, 4
        %v698 = vpop.permute.xlu0 %697
        %vm699 = vcmask 31744
        %v700 = vsel %vm699, %v696, %v698
        %v704 = vmul.f32 %v681, %v696
        %v705 = vmul.f32 %v682, %v700
        %v706 = vmul.f32 %v683, %v698
        %710 = vrot.lane.b32.xlu0 %v704, 124
        %v711 = vpop.permute.xlu0 %710
        %712 = vrot.lane.b32.xlu0 %v705, 124
        %v713 = vpop.permute.xlu0 %712
        %714 = vrot.lane.b32.xlu0 %v706, 124
        %v715 = vpop.permute.xlu0 %714
        %vm716 = vcmask 1014784
        %v717 = vsel %vm716, %v711, %v713
        %v718 = vsel %vm716, %v713, %v715
        %721 = vst [vmem:[#allocation3 + $0xb0] sm:$0xff] %v717
        %722 = vst [vmem:[#allocation3 + $0xb8] sm:$0xff] %v718
        %v723 = vld [vmem:[#allocation2] sm:$0xff]
        %v724 = vld [vmem:[#allocation2 + $0x8] sm:$0xff]
        %v725 = vld [vmem:[#allocation2 + $0x10] sm:$0xff]
        %v726 = vld [vmem:[%s8] ss:$4 sm:$0x3]
        %v728 = vlaneseq
        %v729 = vshrl.u32 %v728, 7
        %v730 = vsub.s32 0, %v729
        %v731 = vrot.slane %v726, %v730
        %v732 = vlaneseq
        %v733 = vshrl.u32 %v732, 7
        %v734 = vsub.s32 1, %v733
        %v735 = vrot.slane %v726, %v734
        %736 = vrot.lane.b32.xlu0 %v731, 33
        %v737 = vpop.permute.xlu0 %736
        %738 = vrot.lane.b32.xlu0 %v735, 33
        %v739 = vpop.permute.xlu0 %738
        %vm740 = vcmask 269312
        %v741 = vsel %vm740, %v737, %v739
        %v745 = vmul.f32 %v723, %v737
        %v746 = vmul.f32 %v724, %v741
        %v747 = vmul.f32 %v725, %v739
        %751 = vrot.lane.b32.xlu0 %v745, 95
        %v752 = vpop.permute.xlu0 %751
        %753 = vrot.lane.b32.xlu0 %v746, 95
        %v754 = vpop.permute.xlu0 %753
        %755 = vrot.lane.b32.xlu0 %v747, 95
        %v756 = vpop.permute.xlu0 %755
        %vm757 = vcmask 777216
        %v758 = vsel %vm757, %v752, %v754
        %v759 = vsel %vm757, %v754, %v756
        %762 = vst [vmem:[#allocation3 + $0x30] sm:$0xff] %v758
        %763 = vst [vmem:[#allocation3 + $0x38] sm:$0xff] %v759
        %v764 = vld [vmem:[#allocation2 + $0x18] sm:$0xff]
        %v765 = vld [vmem:[#allocation2 + $0x20] sm:$0xff]
        %v766 = vld [vmem:[#allocation2 + $0x28] sm:$0xff]
        %v767 = vld [vmem:[%s584] ss:$4 sm:$0x3]
        %v769 = vlaneseq
        %v770 = vshrl.u32 %v769, 7
        %v771 = vsub.s32 0, %v770
        %v772 = vrot.slane %v767, %v771
        %v773 = vlaneseq
        %v774 = vshrl.u32 %v773, 7
        %v775 = vsub.s32 1, %v774
        %v776 = vrot.slane %v767, %v775
        %777 = vrot.lane.b32.xlu0 %v772, 32
        %v778 = vpop.permute.xlu0 %777
        %779 = vrot.lane.b32.xlu0 %v776, 32
        %v780 = vpop.permute.xlu0 %779
        %v781 = vsel %vm454, %v778, %v780
        %v785 = vmul.f32 %v764, %v778
        %v786 = vmul.f32 %v765, %v781
        %v787 = vmul.f32 %v766, %v780
        %791 = vrot.lane.b32.xlu0 %v785, 96
        %v792 = vpop.permute.xlu0 %791
        %793 = vrot.lane.b32.xlu0 %v786, 96
        %v794 = vpop.permute.xlu0 %793
        %795 = vrot.lane.b32.xlu0 %v787, 96
        %v796 = vpop.permute.xlu0 %795
        %vm797 = vcmask 785408
        %v798 = vsel %vm797, %v792, %v794
        %v799 = vsel %vm797, %v794, %v796
        %802 = vst [vmem:[#allocation3 + $0xc0] sm:$0xff] %v798
        %803 = vst [vmem:[#allocation3 + $0xc8] sm:$0xff] %v799
        %v804 = vld [vmem:[#allocation2] sm:$0xff]
        %v805 = vld [vmem:[#allocation2 + $0x8] sm:$0xff]
        %v806 = vld [vmem:[#allocation2 + $0x10] sm:$0xff]
        %810 = vrot.lane.b32.xlu0 %v804, 94
        %v811 = vpop.permute.xlu0 %810
        %812 = vrot.lane.b32.xlu0 %v805, 94
        %v813 = vpop.permute.xlu0 %812
        %814 = vrot.lane.b32.xlu0 %v806, 94
        %v815 = vpop.permute.xlu0 %814
        %vm816 = vcmask 769024
        %v817 = vsel %vm816, %v811, %v813
        %v818 = vsel %vm816, %v813, %v815
        %821 = vst [vmem:[#allocation3 + $0x40] sm:$0xff] %v817
        %822 = vst [vmem:[#allocation3 + $0x48] sm:$0xff] %v818
        %v823 = vld [vmem:[#allocation2 + $0x18] sm:$0xff]
        %v824 = vld [vmem:[#allocation2 + $0x20] sm:$0xff]
        %v825 = vld [vmem:[#allocation2 + $0x28] sm:$0xff]
        %829 = vrot.lane.b32.xlu0 %v823, 94
        %v830 = vpop.permute.xlu0 %829
        %831 = vrot.lane.b32.xlu0 %v824, 94
        %v832 = vpop.permute.xlu0 %831
        %833 = vrot.lane.b32.xlu0 %v825, 94
        %v834 = vpop.permute.xlu0 %833
        %v835 = vsel %vm816, %v830, %v832
        %v836 = vsel %vm816, %v832, %v834
        %839 = vst [vmem:[#allocation3 + $0xd0] sm:$0xff] %v835
        %840 = vst [vmem:[#allocation3 + $0xd8] sm:$0xff] %v836
        %v841 = vld [vmem:[#allocation2] sm:$0xff]
        %v842 = vld [vmem:[#allocation2 + $0x8] sm:$0xff]
        %v843 = vld [vmem:[#allocation2 + $0x10] sm:$0xff]
        %v844 = vld [vmem:[%s642] ss:$4 sm:$0x3]
        %v846 = vlaneseq
        %v847 = vshrl.u32 %v846, 7
        %v848 = vsub.s32 0, %v847
        %v849 = vrot.slane %v844, %v848
        %v850 = vlaneseq
        %v851 = vshrl.u32 %v850, 7
        %v852 = vsub.s32 1, %v851
        %v853 = vrot.slane %v844, %v852
        %854 = vrot.lane.b32.xlu0 %v849, 35
        %v855 = vpop.permute.xlu0 %854
        %856 = vrot.lane.b32.xlu0 %v853, 35
        %v857 = vpop.permute.xlu0 %856
        %vm858 = vcmask 285696
        %v859 = vsel %vm858, %v855, %v857
        %v863 = vmul.f32 %v841, %v855
        %v864 = vmul.f32 %v842, %v859
        %v865 = vmul.f32 %v843, %v857
        %869 = vrot.lane.b32.xlu0 %v863, 93
        %v870 = vpop.permute.xlu0 %869
        %871 = vrot.lane.b32.xlu0 %v864, 93
        %v872 = vpop.permute.xlu0 %871
        %873 = vrot.lane.b32.xlu0 %v865, 93
        %v874 = vpop.permute.xlu0 %873
        %vm875 = vcmask 760832
        %v876 = vsel %vm875, %v870, %v872
        %v877 = vsel %vm875, %v872, %v874
        %880 = vst [vmem:[#allocation3 + $0x50] sm:$0xff] %v876
        %881 = vst [vmem:[#allocation3 + $0x58] sm:$0xff] %v877
        %v882 = vld [vmem:[#allocation2 + $0x18] sm:$0xff]
        %v883 = vld [vmem:[#allocation2 + $0x20] sm:$0xff]
        %v884 = vld [vmem:[#allocation2 + $0x28] sm:$0xff]
        %v885 = vld [vmem:[%s684] ss:$4 sm:$0x3]
        %v887 = vlaneseq
        %v888 = vshrl.u32 %v887, 7
        %v889 = vsub.s32 0, %v888
        %v890 = vrot.slane %v885, %v889
        %v891 = vlaneseq
        %v892 = vshrl.u32 %v891, 7
        %v893 = vsub.s32 1, %v892
        %v894 = vrot.slane %v885, %v893
        %895 = vrot.lane.b32.xlu0 %v890, 36
        %v896 = vpop.permute.xlu0 %895
        %897 = vrot.lane.b32.xlu0 %v894, 36
        %v898 = vpop.permute.xlu0 %897
        %vm899 = vcmask 293888
        %v900 = vsel %vm899, %v896, %v898
        %v904 = vmul.f32 %v882, %v896
        %v905 = vmul.f32 %v883, %v900
        %v906 = vmul.f32 %v884, %v898
        %910 = vrot.lane.b32.xlu0 %v904, 92
        %v911 = vpop.permute.xlu0 %910
        %912 = vrot.lane.b32.xlu0 %v905, 92
        %v913 = vpop.permute.xlu0 %912
        %914 = vrot.lane.b32.xlu0 %v906, 92
        %v915 = vpop.permute.xlu0 %914
        %vm916 = vcmask 752640
        %v917 = vsel %vm916, %v911, %v913
        %v918 = vsel %vm916, %v913, %v915
        %921 = vst [vmem:[#allocation3 + $0xe0] sm:$0xff] %v917
        %922 = vst [vmem:[#allocation3 + $0xe8] sm:$0xff] %v918
        %v923 = vld [vmem:[#allocation2] sm:$0xff]
        %v924 = vld [vmem:[#allocation2 + $0x8] sm:$0xff]
        %v925 = vld [vmem:[#allocation2 + $0x10] sm:$0xff]
        %v926 = vld [vmem:[%s8] ss:$4 sm:$0x3]
        %v928 = vlaneseq
        %v929 = vshrl.u32 %v928, 7
        %v930 = vsub.s32 0, %v929
        %v931 = vrot.slane %v926, %v930
        %v932 = vlaneseq
        %v933 = vshrl.u32 %v932, 7
        %v934 = vsub.s32 1, %v933
        %v935 = vrot.slane %v926, %v934
        %936 = vrot.lane.b32.xlu0 %v931, 49
        %v937 = vpop.permute.xlu0 %936
        %938 = vrot.lane.b32.xlu0 %v935, 49
        %v939 = vpop.permute.xlu0 %938
        %vm940 = vcmask 400384
        %v941 = vsel %vm940, %v937, %v939
        %v945 = vmul.f32 %v923, %v937
        %v946 = vmul.f32 %v924, %v941
        %v947 = vmul.f32 %v925, %v939
        %951 = vrot.lane.b32.xlu0 %v945, 79
        %v952 = vpop.permute.xlu0 %951
        %953 = vrot.lane.b32.xlu0 %v946, 79
        %v954 = vpop.permute.xlu0 %953
        %955 = vrot.lane.b32.xlu0 %v947, 79
        %v956 = vpop.permute.xlu0 %955
        %vm957 = vcmask 646144
        %v958 = vsel %vm957, %v952, %v954
        %v959 = vsel %vm957, %v954, %v956
        %962 = vst [vmem:[#allocation3 + $0x60] sm:$0xff] %v958
        %963 = vst [vmem:[#allocation3 + $0x68] sm:$0xff] %v959
        %v964 = vld [vmem:[#allocation2 + $0x18] sm:$0xff]
        %v965 = vld [vmem:[#allocation2 + $0x20] sm:$0xff]
        %v966 = vld [vmem:[#allocation2 + $0x28] sm:$0xff]
        %v967 = vld [vmem:[%s584] ss:$4 sm:$0x3]
        %v969 = vlaneseq
        %v970 = vshrl.u32 %v969, 7
        %v971 = vsub.s32 0, %v970
        %v972 = vrot.slane %v967, %v971
        %v973 = vlaneseq
        %v974 = vshrl.u32 %v973, 7
        %v975 = vsub.s32 1, %v974
        %v976 = vrot.slane %v967, %v975
        %977 = vrot.lane.b32.xlu0 %v972, 64
        %v978 = vpop.permute.xlu0 %977
        %979 = vrot.lane.b32.xlu0 %v976, 64
        %v980 = vpop.permute.xlu0 %979
        %vm981 = vcmask 523264
        %v982 = vsel %vm981, %v978, %v980
        %v986 = vmul.f32 %v964, %v978
        %v987 = vmul.f32 %v965, %v982
        %v988 = vmul.f32 %v966, %v980
        %992 = vrot.lane.b32.xlu0 %v986, 64
        %v993 = vpop.permute.xlu0 %992
        %994 = vrot.lane.b32.xlu0 %v987, 64
        %v995 = vpop.permute.xlu0 %994
        %996 = vrot.lane.b32.xlu0 %v988, 64
        %v997 = vpop.permute.xlu0 %996
        %v998 = vsel %vm981, %v993, %v995
        %v999 = vsel %vm981, %v995, %v997
        %1002 = vst [vmem:[#allocation3 + $0xf0] sm:$0xff] %v998
        %1003 = vst [vmem:[#allocation3 + $0xf8] sm:$0xff] %v999
        %v1004 = vld [vmem:[#allocation2] sm:$0xff]
        %v1005 = vld [vmem:[#allocation2 + $0x8] sm:$0xff]
        %v1006 = vld [vmem:[#allocation2 + $0x10] sm:$0xff]
        %1010 = vrot.lane.b32.xlu0 %v1004, 78
        %v1011 = vpop.permute.xlu0 %1010
        %1012 = vrot.lane.b32.xlu0 %v1005, 78
        %v1013 = vpop.permute.xlu0 %1012
        %1014 = vrot.lane.b32.xlu0 %v1006, 78
        %v1015 = vpop.permute.xlu0 %1014
        %vm1016 = vcmask 637952
        %v1017 = vsel %vm1016, %v1011, %v1013
        %v1018 = vsel %vm1016, %v1013, %v1015
        %1021 = vst [vmem:[#allocation3 + $0x70] sm:$0xff] %v1017
        %1022 = vst [vmem:[#allocation3 + $0x78] sm:$0xff] %v1018
        %v1023 = vld [vmem:[#allocation2 + $0x18] sm:$0xff]
        %v1024 = vld [vmem:[#allocation2 + $0x20] sm:$0xff]
        %v1025 = vld [vmem:[#allocation2 + $0x28] sm:$0xff]
        %1029 = vrot.lane.b32.xlu0 %v1023, 62
        %v1030 = vpop.permute.xlu0 %1029
        %1031 = vrot.lane.b32.xlu0 %v1024, 62
        %v1032 = vpop.permute.xlu0 %1031
        %1033 = vrot.lane.b32.xlu0 %v1025, 62
        %v1034 = vpop.permute.xlu0 %1033
        %vm1035 = vcmask 506880
        %v1036 = vsel %vm1035, %v1030, %v1032
        %v1037 = vsel %vm1035, %v1032, %v1034
        %1040 = vst [vmem:[#allocation3 + $0x100] sm:$0xff] %v1036
        %1041 = vst [vmem:[#allocation3 + $0x108] sm:$0xff] %v1037
        %v1042 = vld [vmem:[#allocation2] sm:$0xff]
        %v1043 = vld [vmem:[#allocation2 + $0x8] sm:$0xff]
        %v1044 = vld [vmem:[#allocation2 + $0x10] sm:$0xff]
        %v1045 = vld [vmem:[%s642] ss:$4 sm:$0x3]
        %v1047 = vlaneseq
        %v1048 = vshrl.u32 %v1047, 7
        %v1049 = vsub.s32 0, %v1048
        %v1050 = vrot.slane %v1045, %v1049
        %v1051 = vlaneseq
        %v1052 = vshrl.u32 %v1051, 7
        %v1053 = vsub.s32 1, %v1052
        %v1054 = vrot.slane %v1045, %v1053
        %1055 = vrot.lane.b32.xlu0 %v1050, 51
        %v1056 = vpop.permute.xlu0 %1055
        %1057 = vrot.lane.b32.xlu0 %v1054, 51
        %v1058 = vpop.permute.xlu0 %1057
        %vm1059 = vcmask 416768
        %v1060 = vsel %vm1059, %v1056, %v1058
        %v1064 = vmul.f32 %v1042, %v1056
        %v1065 = vmul.f32 %v1043, %v1060
        %v1066 = vmul.f32 %v1044, %v1058
        %1070 = vrot.lane.b32.xlu0 %v1064, 77
        %v1071 = vpop.permute.xlu0 %1070
        %1072 = vrot.lane.b32.xlu0 %v1065, 77
        %v1073 = vpop.permute.xlu0 %1072
        %1074 = vrot.lane.b32.xlu0 %v1066, 77
        %v1075 = vpop.permute.xlu0 %1074
        %vm1076 = vcmask 629760
        %v1077 = vsel %vm1076, %v1071, %v1073
        %v1078 = vsel %vm1076, %v1073, %v1075
        %1081 = vst [vmem:[#allocation3 + $0x80] sm:$0xff] %v1077
        %1082 = vst [vmem:[#allocation3 + $0x88] sm:$0xff] %v1078
        %v1083 = vld [vmem:[#allocation2 + $0x18] sm:$0xff]
        %v1084 = vld [vmem:[#allocation2 + $0x20] sm:$0xff]
        %v1085 = vld [vmem:[#allocation2 + $0x28] sm:$0xff]
        %v1086 = vld [vmem:[%s684] ss:$4 sm:$0x3]
        %v1088 = vlaneseq
        %v1089 = vshrl.u32 %v1088, 7
        %v1090 = vsub.s32 0, %v1089
        %v1091 = vrot.slane %v1086, %v1090
        %v1092 = vlaneseq
        %v1093 = vshrl.u32 %v1092, 7
        %v1094 = vsub.s32 1, %v1093
        %v1095 = vrot.slane %v1086, %v1094
        %1096 = vrot.lane.b32.xlu0 %v1091, 68
        %v1097 = vpop.permute.xlu0 %1096
        %1098 = vrot.lane.b32.xlu0 %v1095, 68
        %v1099 = vpop.permute.xlu0 %1098
        %vm1100 = vcmask 556032
        %v1101 = vsel %vm1100, %v1097, %v1099
        %v1105 = vmul.f32 %v1083, %v1097
        %v1106 = vmul.f32 %v1084, %v1101
        %v1107 = vmul.f32 %v1085, %v1099
        %1111 = vrot.lane.b32.xlu0 %v1105, 60
        %v1112 = vpop.permute.xlu0 %1111
        %1113 = vrot.lane.b32.xlu0 %v1106, 60
        %v1114 = vpop.permute.xlu0 %1113
        %1115 = vrot.lane.b32.xlu0 %v1107, 60
        %v1116 = vpop.permute.xlu0 %1115
        %vm1117 = vcmask 490496
        %v1118 = vsel %vm1117, %v1112, %v1114
        %v1119 = vsel %vm1117, %v1114, %v1116
        %1122 = vst [vmem:[#allocation3 + $0x110] sm:$0xff] %v1118
        %1123 = vst [vmem:[#allocation3 + $0x118] sm:$0xff] %v1119
        %v1124 = vld [vmem:[#allocation10] sm:$0xff]
        %v1125 = vld [vmem:[#allocation10 + $0x8] sm:$0xff]
        %v1126 = vld [vmem:[#allocation10 + $0x10] sm:$0xff]
        %v1127 = vld [vmem:[#allocation10 + $0x18] sm:$0xff]
        %v1128 = vld [vmem:[#allocation3] sm:$0xff]
        %v1129 = vld [vmem:[#allocation3 + $0x8] sm:$0xff]
        %v1130 = vld [vmem:[#allocation3 + $0x10] sm:$0xff]
        %v1131 = vld [vmem:[#allocation3 + $0x18] sm:$0xff]
        %v1132 = vld [vmem:[#allocation3 + $0x20] sm:$0xff]
        %v1133 = vld [vmem:[#allocation3 + $0x28] sm:$0xff]
        %v1134 = vld [vmem:[#allocation3 + $0x30] sm:$0xff]
        %v1135 = vld [vmem:[#allocation3 + $0x38] sm:$0xff]
        %v1136 = vld [vmem:[#allocation3 + $0x40] sm:$0xff]
        %v1137 = vld [vmem:[#allocation3 + $0x48] sm:$0xff]
        %v1138 = vld [vmem:[#allocation3 + $0x50] sm:$0xff]
        %v1139 = vld [vmem:[#allocation3 + $0x58] sm:$0xff]
        %v1140 = vld [vmem:[#allocation3 + $0x60] sm:$0xff]
        %v1141 = vld [vmem:[#allocation3 + $0x68] sm:$0xff]
        %v1142 = vld [vmem:[#allocation3 + $0x70] sm:$0xff]
        %v1143 = vld [vmem:[#allocation3 + $0x78] sm:$0xff]
        %v1144 = vld [vmem:[#allocation3 + $0x80] sm:$0xff]
        %v1145 = vld [vmem:[#allocation3 + $0x88] sm:$0xff]
        %v1146 = vld [vmem:[#allocation3 + $0x90] sm:$0xff]
        %v1147 = vld [vmem:[#allocation3 + $0x98] sm:$0xff]
        %v1148 = vld [vmem:[#allocation3 + $0xa0] sm:$0xff]
        %v1149 = vld [vmem:[#allocation3 + $0xa8] sm:$0xff]
        %v1150 = vld [vmem:[#allocation3 + $0xb0] sm:$0xff]
        %v1151 = vld [vmem:[#allocation3 + $0xb8] sm:$0xff]
        %v1152 = vld [vmem:[#allocation3 + $0xc0] sm:$0xff]
        %v1153 = vld [vmem:[#allocation3 + $0xc8] sm:$0xff]
        %v1154 = vld [vmem:[#allocation3 + $0xd0] sm:$0xff]
        %v1155 = vld [vmem:[#allocation3 + $0xd8] sm:$0xff]
        %v1156 = vld [vmem:[#allocation3 + $0xe0] sm:$0xff]
        %v1157 = vld [vmem:[#allocation3 + $0xe8] sm:$0xff]
        %v1158 = vld [vmem:[#allocation3 + $0xf0] sm:$0xff]
        %v1159 = vld [vmem:[#allocation3 + $0xf8] sm:$0xff]
        %v1160 = vld [vmem:[#allocation3 + $0x100] sm:$0xff]
        %v1161 = vld [vmem:[#allocation3 + $0x108] sm:$0xff]
        %v1162 = vld [vmem:[#allocation3 + $0x110] sm:$0xff]
        %v1163 = vld [vmem:[#allocation3 + $0x118] sm:$0xff]
        %v1164 = vld [vmem:[#allocation3 + $0x120] sm:$0x1]
        %v1165 = vld [vmem:[#allocation3 + $0x128] sm:$0x1]
        %v1166 = vld [vmem:[%s3] sm:$0xf]
        %v1167 = vld [vmem:[%s3 + $0x4] sm:$0xf]
        %v1168 = vld [vmem:[%s374] sm:$0xff]
        %v1169 = vld [vmem:[%s374 + $0x8] sm:$0xff]
        %v1170 = vld [vmem:[%s374 + $0x10] sm:$0xff]
        %v1171 = vld [vmem:[%s374 + $0x18] sm:$0xff]
        %v1174 = vunpack.c.l.b16 %v1166
        %v1175 = vunpack.c.l.b16 %v1167
        %v1176 = vpack.c.b16 %v1175, %v1174
        %v1181 = vunpack.c.l.b16 %v1168
        %v1182 = vunpack.c.h.b16 %v1168
        %v1183 = vunpack.c.l.b16 %v1169
        %v1184 = vunpack.c.h.b16 %v1169
        %v1185 = vunpack.c.l.b16 %v1170
        %v1186 = vunpack.c.h.b16 %v1170
        %v1187 = vunpack.c.l.b16 %v1171
        %v1188 = vunpack.c.h.b16 %v1171
        %v1189 = vpack.c.b16 %v1183, %v1181
        %v1190 = vpack.c.b16 %v1184, %v1182
        %v1191 = vpack.c.b16 %v1187, %v1185
        %v1192 = vpack.c.b16 %v1188, %v1186
        %v1198 = vsel %vm454, %v1176, 0
        %1200 = vmatprep.subr.bf16.mxu0 0
        %1201 = vmatpush1.bf16.msra.mxu0 0
        %1202 = vmatprep.subr.bf16.mxu0 0
        %1203 = vmatpush1.bf16.msra.mxu0 0
        %1204 = vmatprep.subr.bf16.mxu0 0
        %1205 = vmatpush1.bf16.msra.mxu0 0
        %1206 = vmatprep.subr.bf16.mxu0 0
        %1207 = vmatpush1.bf16.msra.mxu0 0
        %1208 = vmatprep.subr.bf16.mxu0 0
        %1209 = vmatpush1.bf16.msra.mxu0 0
        %1210 = vmatprep.subr.bf16.mxu0 0
        %1211 = vmatpush1.bf16.msra.mxu0 0
        %1212 = vmatprep.subr.bf16.mxu0 %v1192
        %1213 = vmatpush1.bf16.msra.mxu0 %v1191
        %1214 = vmatprep.subr.bf16.mxu0 %v1190
        %1215 = vmatpush1.bf16.msra.mxu0 %v1189
        %1216 = vmatprep.subr.bf16.mxu0 0
        %1217 = vmatpush2.bf16.msra.mxu0 0
        %1218 = vmatprep.subr.bf16.mxu0 0
        %1219 = vmatpush2.bf16.msra.mxu0 0
        %1220 = vmatprep.subr.bf16.mxu0 0
        %1221 = vmatpush2.bf16.msra.mxu0 0
        %1222 = vmatprep.subr.bf16.mxu0 0
        %1223 = vmatpush2.bf16.msra.mxu0 0
        %1224 = vmatprep.subr.bf16.mxu0 0
        %1225 = vmatpush2.bf16.msra.mxu0 0
        %1226 = vmatprep.subr.bf16.mxu0 0
        %1227 = vmatpush2.bf16.msra.mxu0 0
        %1228 = vmatprep.subr.bf16.mxu0 0
        %1229 = vmatpush2.bf16.msra.mxu0 0
        %1230 = vmatprep.subr.bf16.mxu0 0
        %1231 = vmatpush2.bf16.msra.mxu0 0
        %1232 = vmatprep.mubr.bf16.mxu0 0
        %1233 = vmatmul.mubr.bf16.gmra.mxu0 %v1198
        %v1234 = vpop.f32.mrf.mxu0
        %v1235 = vadd.f32 0.0, %v1234
        %v1236 = vpop.f32.mrf.mxu0
        %v1237 = vadd.f32 0.0, %v1236
        %v1238 = vpop.f32.mrf.mxu0
        %v1239 = vadd.f32 0.0, %v1238
        %v1240 = vpop.f32.mrf.mxu0
        %v1241 = vadd.f32 0.0, %v1240
        %1242 = vdwg.mxu0
        %v1244 = vsel %vm558, %v1125, 0
        %v1247 = vsel %vm558, %v1127, 0
        %vm1249 = vcmask 1040384
        %v1251 = vsel %vm1249, %v1164, 0
        %v1254 = vsel %vm1249, %v1165, 0
        %1256 = vmatprep.subr.mxu0 %v1159
        %1257 = vmatpush1.msra.mxu0 %v1158
        %1258 = vmatprep.subr.mxu0 %v1157
        %1259 = vmatpush1.msra.mxu0 %v1156
        %1260 = vmatprep.subr.mxu0 %v1155
        %1261 = vmatpush1.msra.mxu0 %v1154
        %1262 = vmatprep.subr.mxu0 %v1153
        %1263 = vmatpush1.msra.mxu0 %v1152
        %1264 = vmatprep.subr.mxu0 %v1151
        %1265 = vmatpush1.msra.mxu0 %v1150
        %1266 = vmatprep.subr.mxu0 %v1149
        %1267 = vmatpush1.msra.mxu0 %v1148
        %1268 = vmatprep.subr.mxu0 %v1147
        %1269 = vmatpush1.msra.mxu0 %v1146
        %1270 = vmatprep.subr.mxu0 %v1145
        %1271 = vmatpush1.msra.mxu0 %v1144
        %1272 = vmatprep.subr.mxu0 %v1143
        %1273 = vmatpush1.msra.mxu0 %v1142
        %1274 = vmatprep.subr.mxu0 %v1141
        %1275 = vmatpush1.msra.mxu0 %v1140
        %1276 = vmatprep.subr.mxu0 %v1139
        %1277 = vmatpush1.msra.mxu0 %v1138
        %1278 = vmatprep.subr.mxu0 %v1137
        %1279 = vmatpush1.msra.mxu0 %v1136
        %1280 = vmatprep.subr.mxu0 %v1135
        %1281 = vmatpush1.msra.mxu0 %v1134
        %1282 = vmatprep.subr.mxu0 %v1133
        %1283 = vmatpush1.msra.mxu0 %v1132
        %1284 = vmatprep.subr.mxu0 %v1131
        %1285 = vmatpush1.msra.mxu0 %v1130
        %1286 = vmatprep.subr.mxu0 %v1129
        %1287 = vmatpush1.msra.mxu0 %v1128
        %1288 = vmatprep.subr.mxu0 0.0
        %1289 = vmatpush2.msra.mxu0 0.0
        %1290 = vmatprep.subr.mxu0 0.0
        %1291 = vmatpush2.msra.mxu0 0.0
        %1292 = vmatprep.subr.mxu0 0.0
        %1293 = vmatpush2.msra.mxu0 0.0
        %1294 = vmatprep.subr.mxu0 0.0
        %1295 = vmatpush2.msra.mxu0 0.0
        %1296 = vmatprep.subr.mxu0 0.0
        %1297 = vmatpush2.msra.mxu0 0.0
        %1298 = vmatprep.subr.mxu0 0.0
        %1299 = vmatpush2.msra.mxu0 0.0
        %1300 = vmatprep.subr.mxu0 0.0
        %1301 = vmatpush2.msra.mxu0 0.0
        %1302 = vmatprep.subr.mxu0 0.0
        %1303 = vmatpush2.msra.mxu0 0.0
        %1304 = vmatprep.subr.mxu0 0.0
        %1305 = vmatpush2.msra.mxu0 0.0
        %1306 = vmatprep.subr.mxu0 0.0
        %1307 = vmatpush2.msra.mxu0 0.0
        %1308 = vmatprep.subr.mxu0 0.0
        %1309 = vmatpush2.msra.mxu0 0.0
        %1310 = vmatprep.subr.mxu0 0.0
        %1311 = vmatpush2.msra.mxu0 0.0
        %1312 = vmatprep.subr.mxu0 0.0
        %1313 = vmatpush2.msra.mxu0 0.0
        %1314 = vmatprep.subr.mxu0 %v1254
        %1315 = vmatpush2.msra.mxu0 %v1251
        %1316 = vmatprep.subr.mxu0 %v1163
        %1317 = vmatpush2.msra.mxu0 %v1162
        %1318 = vmatprep.subr.mxu0 %v1161
        %1319 = vmatpush2.msra.mxu0 %v1160
        %1320 = vmatprep.mubr.f32.mxu0 %v1244
        %1321 = vmatmul.mubr.f32.gmra.mxu0 %v1124
        %v1322 = vpop.f32.mrf.mxu0
        %v1323 = vadd.f32 %v1235, %v1322
        %v1324 = vpop.f32.mrf.mxu0
        %v1325 = vadd.f32 %v1237, %v1324
        %1326 = vmatprep.mubr.f32.mxu0 %v1247
        %1327 = vmatmul.mubr.f32.gmra.mxu0 %v1126
        %v1328 = vpop.f32.mrf.mxu0
        %v1329 = vadd.f32 %v1239, %v1328
        %v1330 = vpop.f32.mrf.mxu0
        %v1331 = vadd.f32 %v1241, %v1330
        %1332 = vdwg.mxu0
        %vm1333 = vcmp.gt.f32.partialorder %v1323, 0.0
        %vm1334 = vcmp.gt.f32.partialorder %v1325, 0.0
        %vm1335 = vcmp.gt.f32.partialorder %v1329, 0.0
        %vm1336 = vcmp.gt.f32.partialorder %v1331, 0.0
        %v1337 = vld [vmem:[%s6] sm:$0xff]
        %v1338 = vld [vmem:[%s6 + $0x8] sm:$0xff]
        %1340 = vset.pattern.permute.xlu0 0
        %1341 = vperm.xlu0 %1340, %v1337
        %v1342 = vpop.permute.xlu0 %1341
        %1345 = vset.pattern.permute.xlu0 0
        %1346 = vperm.xlu0 %1345, %v1338
        %v1347 = vpop.permute.xlu0 %1346
        %v1349 = vmul.f32 %v1342, %v1323
        %v1350 = vmul.f32 %v1342, %v1325
        %v1351 = vmul.f32 %v1347, %v1329
        %v1352 = vmul.f32 %v1347, %v1331
        %v1353 = vsel %vm1333, %v1323, %v1349
        %v1354 = vsel %vm1334, %v1325, %v1350
        %v1355 = vsel %vm1335, %v1329, %v1351
        %v1356 = vsel %vm1336, %v1331, %v1352
        %1361 = vrot.lane.b32.xlu0 %v1353, 34
        %v1362 = vpop.permute.xlu0 %1361
        %1363 = vrot.lane.b32.xlu0 %v1354, 34
        %v1364 = vpop.permute.xlu0 %1363
        %1365 = vrot.lane.b32.xlu0 %v1355, 34
        %v1366 = vpop.permute.xlu0 %1365
        %1367 = vrot.lane.b32.xlu0 %v1356, 34
        %v1368 = vpop.permute.xlu0 %1367
        %v1369 = vsel %vm501, %v1362, %v1364
        %v1370 = vsel %vm501, %v1366, %v1368
        %1377 = vst.msk [vmem:[#allocation2] sm:$0xff] %vm527, %v1362
        %1378 = vst [vmem:[#allocation2 + $0x8] sm:$0xff] %v1369
        %1379 = vst.msk [vmem:[#allocation2 + $0x10] sm:$0xff] %vm501, %v1364
        %1380 = vst.msk [vmem:[#allocation2 + $0x18] sm:$0xff] %vm527, %v1366
        %1381 = vst [vmem:[#allocation2 + $0x20] sm:$0xff] %v1370
        %1382 = vst.msk [vmem:[#allocation2 + $0x28] sm:$0xff] %vm501, %v1368
        %v1383 = vld [vmem:[#allocation2] sm:$0xff]
        %v1384 = vld [vmem:[#allocation2 + $0x8] sm:$0xff]
        %v1385 = vld [vmem:[#allocation2 + $0x10] sm:$0xff]
        %v1386 = vld [vmem:[#allocation2 + $0x18] sm:$0xff]
        %v1387 = vld [vmem:[#allocation2 + $0x20] sm:$0xff]
        %v1388 = vld [vmem:[#allocation2 + $0x28] sm:$0xff]
        %v1389 = vld [vmem:[%s8] ss:$4 sm:$0x3]
        %v1391 = vlaneseq
        %v1392 = vshrl.u32 %v1391, 7
        %v1393 = vsub.s32 0, %v1392
        %v1394 = vrot.slane %v1389, %v1393
        %v1395 = vlaneseq
        %v1396 = vshrl.u32 %v1395, 7
        %v1397 = vsub.s32 1, %v1396
        %v1398 = vrot.slane %v1389, %v1397
        %1399 = vrot.lane.b32.xlu0 %v1394, 17
        %v1400 = vpop.permute.xlu0 %1399
        %1401 = vrot.lane.b32.xlu0 %v1398, 17
        %v1402 = vpop.permute.xlu0 %1401
        %v1403 = vsel %vm558, %v1400, %v1402
        %v1407 = vmul.f32 %v1383, %v1400
        %v1408 = vmul.f32 %v1384, %v1403
        %v1409 = vmul.f32 %v1385, %v1402
        %v1410 = vmul.f32 %v1386, %v1400
        %v1411 = vmul.f32 %v1387, %v1403
        %v1412 = vmul.f32 %v1388, %v1402
        %1419 = vrot.lane.b32.xlu0 %v1407, 111
        %v1420 = vpop.permute.xlu0 %1419
        %1421 = vrot.lane.b32.xlu0 %v1408, 111
        %v1422 = vpop.permute.xlu0 %1421
        %1423 = vrot.lane.b32.xlu0 %v1409, 111
        %v1424 = vpop.permute.xlu0 %1423
        %1425 = vrot.lane.b32.xlu0 %v1410, 111
        %v1426 = vpop.permute.xlu0 %1425
        %1427 = vrot.lane.b32.xlu0 %v1411, 111
        %v1428 = vpop.permute.xlu0 %1427
        %1429 = vrot.lane.b32.xlu0 %v1412, 111
        %v1430 = vpop.permute.xlu0 %1429
        %v1431 = vsel %vm575, %v1420, %v1422
        %v1432 = vsel %vm575, %v1422, %v1424
        %v1433 = vsel %vm575, %v1426, %v1428
        %v1434 = vsel %vm575, %v1428, %v1430
        %1439 = vst [vmem:[#allocation3] sm:$0xff] %v1431
        %1440 = vst [vmem:[#allocation3 + $0x8] sm:$0xff] %v1432
        %1441 = vst [vmem:[#allocation3 + $0x10] sm:$0xff] %v1433
        %1442 = vst [vmem:[#allocation3 + $0x18] sm:$0xff] %v1434
        %v1443 = vld [vmem:[#allocation2] sm:$0xff]
        %v1444 = vld [vmem:[#allocation2 + $0x8] sm:$0xff]
        %v1445 = vld [vmem:[#allocation2 + $0x10] sm:$0xff]
        %v1446 = vld [vmem:[#allocation2 + $0x18] sm:$0xff]
        %v1447 = vld [vmem:[#allocation2 + $0x20] sm:$0xff]
        %v1448 = vld [vmem:[#allocation2 + $0x28] sm:$0xff]
        %1455 = vrot.lane.b32.xlu0 %v1443, 110
        %v1456 = vpop.permute.xlu0 %1455
        %1457 = vrot.lane.b32.xlu0 %v1444, 110
        %v1458 = vpop.permute.xlu0 %1457
        %1459 = vrot.lane.b32.xlu0 %v1445, 110
        %v1460 = vpop.permute.xlu0 %1459
        %1461 = vrot.lane.b32.xlu0 %v1446, 110
        %v1462 = vpop.permute.xlu0 %1461
        %1463 = vrot.lane.b32.xlu0 %v1447, 110
        %v1464 = vpop.permute.xlu0 %1463
        %1465 = vrot.lane.b32.xlu0 %v1448, 110
        %v1466 = vpop.permute.xlu0 %1465
        %v1467 = vsel %vm613, %v1456, %v1458
        %v1468 = vsel %vm613, %v1458, %v1460
        %v1469 = vsel %vm613, %v1462, %v1464
        %v1470 = vsel %vm613, %v1464, %v1466
        %1475 = vst [vmem:[#allocation3 + $0x20] sm:$0xff] %v1467
        %1476 = vst [vmem:[#allocation3 + $0x28] sm:$0xff] %v1468
        %1477 = vst [vmem:[#allocation3 + $0x30] sm:$0xff] %v1469
        %1478 = vst [vmem:[#allocation3 + $0x38] sm:$0xff] %v1470
        %v1479 = vld [vmem:[#allocation2] sm:$0xff]
        %v1480 = vld [vmem:[#allocation2 + $0x8] sm:$0xff]
        %v1481 = vld [vmem:[#allocation2 + $0x10] sm:$0xff]
        %v1482 = vld [vmem:[#allocation2 + $0x18] sm:$0xff]
        %v1483 = vld [vmem:[#allocation2 + $0x20] sm:$0xff]
        %v1484 = vld [vmem:[#allocation2 + $0x28] sm:$0xff]
        %v1485 = vld [vmem:[%s642] ss:$4 sm:$0x3]
        %v1487 = vlaneseq
        %v1488 = vshrl.u32 %v1487, 7
        %v1489 = vsub.s32 0, %v1488
        %v1490 = vrot.slane %v1485, %v1489
        %v1491 = vlaneseq
        %v1492 = vshrl.u32 %v1491, 7
        %v1493 = vsub.s32 1, %v1492
        %v1494 = vrot.slane %v1485, %v1493
        %1495 = vrot.lane.b32.xlu0 %v1490, 19
        %v1496 = vpop.permute.xlu0 %1495
        %1497 = vrot.lane.b32.xlu0 %v1494, 19
        %v1498 = vpop.permute.xlu0 %1497
        %v1499 = vsel %vm657, %v1496, %v1498
        %v1503 = vmul.f32 %v1479, %v1496
        %v1504 = vmul.f32 %v1480, %v1499
        %v1505 = vmul.f32 %v1481, %v1498
        %v1506 = vmul.f32 %v1482, %v1496
        %v1507 = vmul.f32 %v1483, %v1499
        %v1508 = vmul.f32 %v1484, %v1498
        %1515 = vrot.lane.b32.xlu0 %v1503, 109
        %v1516 = vpop.permute.xlu0 %1515
        %1517 = vrot.lane.b32.xlu0 %v1504, 109
        %v1518 = vpop.permute.xlu0 %1517
        %1519 = vrot.lane.b32.xlu0 %v1505, 109
        %v1520 = vpop.permute.xlu0 %1519
        %1521 = vrot.lane.b32.xlu0 %v1506, 109
        %v1522 = vpop.permute.xlu0 %1521
        %1523 = vrot.lane.b32.xlu0 %v1507, 109
        %v1524 = vpop.permute.xlu0 %1523
        %1525 = vrot.lane.b32.xlu0 %v1508, 109
        %v1526 = vpop.permute.xlu0 %1525
        %v1527 = vsel %vm674, %v1516, %v1518
        %v1528 = vsel %vm674, %v1518, %v1520
        %v1529 = vsel %vm674, %v1522, %v1524
        %v1530 = vsel %vm674, %v1524, %v1526
        %1535 = vst [vmem:[#allocation3 + $0x40] sm:$0xff] %v1527
        %1536 = vst [vmem:[#allocation3 + $0x48] sm:$0xff] %v1528
        %1537 = vst [vmem:[#allocation3 + $0x50] sm:$0xff] %v1529
        %1538 = vst [vmem:[#allocation3 + $0x58] sm:$0xff] %v1530
        %v1539 = vld [vmem:[#allocation2] sm:$0xff]
        %v1540 = vld [vmem:[#allocation2 + $0x8] sm:$0xff]
        %v1541 = vld [vmem:[#allocation2 + $0x10] sm:$0xff]
        %v1542 = vld [vmem:[#allocation2 + $0x18] sm:$0xff]
        %v1543 = vld [vmem:[#allocation2 + $0x20] sm:$0xff]
        %v1544 = vld [vmem:[#allocation2 + $0x28] sm:$0xff]
        %v1545 = vld [vmem:[%s8] ss:$4 sm:$0x3]
        %v1547 = vlaneseq
        %v1548 = vshrl.u32 %v1547, 7
        %v1549 = vsub.s32 0, %v1548
        %v1550 = vrot.slane %v1545, %v1549
        %v1551 = vlaneseq
        %v1552 = vshrl.u32 %v1551, 7
        %v1553 = vsub.s32 1, %v1552
        %v1554 = vrot.slane %v1545, %v1553
        %1555 = vrot.lane.b32.xlu0 %v1550, 33
        %v1556 = vpop.permute.xlu0 %1555
        %1557 = vrot.lane.b32.xlu0 %v1554, 33
        %v1558 = vpop.permute.xlu0 %1557
        %v1559 = vsel %vm740, %v1556, %v1558
        %v1563 = vmul.f32 %v1539, %v1556
        %v1564 = vmul.f32 %v1540, %v1559
        %v1565 = vmul.f32 %v1541, %v1558
        %v1566 = vmul.f32 %v1542, %v1556
        %v1567 = vmul.f32 %v1543, %v1559
        %v1568 = vmul.f32 %v1544, %v1558
        %1575 = vrot.lane.b32.xlu0 %v1563, 95
        %v1576 = vpop.permute.xlu0 %1575
        %1577 = vrot.lane.b32.xlu0 %v1564, 95
        %v1578 = vpop.permute.xlu0 %1577
        %1579 = vrot.lane.b32.xlu0 %v1565, 95
        %v1580 = vpop.permute.xlu0 %1579
        %1581 = vrot.lane.b32.xlu0 %v1566, 95
        %v1582 = vpop.permute.xlu0 %1581
        %1583 = vrot.lane.b32.xlu0 %v1567, 95
        %v1584 = vpop.permute.xlu0 %1583
        %1585 = vrot.lane.b32.xlu0 %v1568, 95
        %v1586 = vpop.permute.xlu0 %1585
        %v1587 = vsel %vm757, %v1576, %v1578
        %v1588 = vsel %vm757, %v1578, %v1580
        %v1589 = vsel %vm757, %v1582, %v1584
        %v1590 = vsel %vm757, %v1584, %v1586
        %1595 = vst [vmem:[#allocation3 + $0x60] sm:$0xff] %v1587
        %1596 = vst [vmem:[#allocation3 + $0x68] sm:$0xff] %v1588
        %1597 = vst [vmem:[#allocation3 + $0x70] sm:$0xff] %v1589
        %1598 = vst [vmem:[#allocation3 + $0x78] sm:$0xff] %v1590
        %v1599 = vld [vmem:[#allocation2] sm:$0xff]
        %v1600 = vld [vmem:[#allocation2 + $0x8] sm:$0xff]
        %v1601 = vld [vmem:[#allocation2 + $0x10] sm:$0xff]
        %v1602 = vld [vmem:[#allocation2 + $0x18] sm:$0xff]
        %v1603 = vld [vmem:[#allocation2 + $0x20] sm:$0xff]
        %v1604 = vld [vmem:[#allocation2 + $0x28] sm:$0xff]
        %1611 = vrot.lane.b32.xlu0 %v1599, 94
        %v1612 = vpop.permute.xlu0 %1611
        %1613 = vrot.lane.b32.xlu0 %v1600, 94
        %v1614 = vpop.permute.xlu0 %1613
        %1615 = vrot.lane.b32.xlu0 %v1601, 94
        %v1616 = vpop.permute.xlu0 %1615
        %1617 = vrot.lane.b32.xlu0 %v1602, 94
        %v1618 = vpop.permute.xlu0 %1617
        %1619 = vrot.lane.b32.xlu0 %v1603, 94
        %v1620 = vpop.permute.xlu0 %1619
        %1621 = vrot.lane.b32.xlu0 %v1604, 94
        %v1622 = vpop.permute.xlu0 %1621
        %v1623 = vsel %vm816, %v1612, %v1614
        %v1624 = vsel %vm816, %v1614, %v1616
        %v1625 = vsel %vm816, %v1618, %v1620
        %v1626 = vsel %vm816, %v1620, %v1622
        %1631 = vst [vmem:[#allocation3 + $0x80] sm:$0xff] %v1623
        %1632 = vst [vmem:[#allocation3 + $0x88] sm:$0xff] %v1624
        %1633 = vst [vmem:[#allocation3 + $0x90] sm:$0xff] %v1625
        %1634 = vst [vmem:[#allocation3 + $0x98] sm:$0xff] %v1626
        %v1635 = vld [vmem:[#allocation2] sm:$0xff]
        %v1636 = vld [vmem:[#allocation2 + $0x8] sm:$0xff]
        %v1637 = vld [vmem:[#allocation2 + $0x10] sm:$0xff]
        %v1638 = vld [vmem:[#allocation2 + $0x18] sm:$0xff]
        %v1639 = vld [vmem:[#allocation2 + $0x20] sm:$0xff]
        %v1640 = vld [vmem:[#allocation2 + $0x28] sm:$0xff]
        %v1641 = vld [vmem:[%s642] ss:$4 sm:$0x3]
        %v1643 = vlaneseq
        %v1644 = vshrl.u32 %v1643, 7
        %v1645 = vsub.s32 0, %v1644
        %v1646 = vrot.slane %v1641, %v1645
        %v1647 = vlaneseq
        %v1648 = vshrl.u32 %v1647, 7
        %v1649 = vsub.s32 1, %v1648
        %v1650 = vrot.slane %v1641, %v1649
        %1651 = vrot.lane.b32.xlu0 %v1646, 35
        %v1652 = vpop.permute.xlu0 %1651
        %1653 = vrot.lane.b32.xlu0 %v1650, 35
        %v1654 = vpop.permute.xlu0 %1653
        %v1655 = vsel %vm858, %v1652, %v1654
        %v1659 = vmul.f32 %v1635, %v1652
        %v1660 = vmul.f32 %v1636, %v1655
        %v1661 = vmul.f32 %v1637, %v1654
        %v1662 = vmul.f32 %v1638, %v1652
        %v1663 = vmul.f32 %v1639, %v1655
        %v1664 = vmul.f32 %v1640, %v1654
        %1671 = vrot.lane.b32.xlu0 %v1659, 93
        %v1672 = vpop.permute.xlu0 %1671
        %1673 = vrot.lane.b32.xlu0 %v1660, 93
        %v1674 = vpop.permute.xlu0 %1673
        %1675 = vrot.lane.b32.xlu0 %v1661, 93
        %v1676 = vpop.permute.xlu0 %1675
        %1677 = vrot.lane.b32.xlu0 %v1662, 93
        %v1678 = vpop.permute.xlu0 %1677
        %1679 = vrot.lane.b32.xlu0 %v1663, 93
        %v1680 = vpop.permute.xlu0 %1679
        %1681 = vrot.lane.b32.xlu0 %v1664, 93
        %v1682 = vpop.permute.xlu0 %1681
        %v1683 = vsel %vm875, %v1672, %v1674
        %v1684 = vsel %vm875, %v1674, %v1676
        %v1685 = vsel %vm875, %v1678, %v1680
        %v1686 = vsel %vm875, %v1680, %v1682
        %1691 = vst [vmem:[#allocation3 + $0xa0] sm:$0xff] %v1683
        %1692 = vst [vmem:[#allocation3 + $0xa8] sm:$0xff] %v1684
        %1693 = vst [vmem:[#allocation3 + $0xb0] sm:$0xff] %v1685
        %1694 = vst [vmem:[#allocation3 + $0xb8] sm:$0xff] %v1686
        %v1695 = vld [vmem:[#allocation2] sm:$0xff]
        %v1696 = vld [vmem:[#allocation2 + $0x8] sm:$0xff]
        %v1697 = vld [vmem:[#allocation2 + $0x10] sm:$0xff]
        %v1698 = vld [vmem:[#allocation2 + $0x18] sm:$0xff]
        %v1699 = vld [vmem:[#allocation2 + $0x20] sm:$0xff]
        %v1700 = vld [vmem:[#allocation2 + $0x28] sm:$0xff]
        %v1701 = vld [vmem:[%s8] ss:$4 sm:$0x3]
        %v1703 = vlaneseq
        %v1704 = vshrl.u32 %v1703, 7
        %v1705 = vsub.s32 0, %v1704
        %v1706 = vrot.slane %v1701, %v1705
        %v1707 = vlaneseq
        %v1708 = vshrl.u32 %v1707, 7
        %v1709 = vsub.s32 1, %v1708
        %v1710 = vrot.slane %v1701, %v1709
        %1711 = vrot.lane.b32.xlu0 %v1706, 49
        %v1712 = vpop.permute.xlu0 %1711
        %1713 = vrot.lane.b32.xlu0 %v1710, 49
        %v1714 = vpop.permute.xlu0 %1713
        %v1715 = vsel %vm940, %v1712, %v1714
        %v1719 = vmul.f32 %v1695, %v1712
        %v1720 = vmul.f32 %v1696, %v1715
        %v1721 = vmul.f32 %v1697, %v1714
        %v1722 = vmul.f32 %v1698, %v1712
        %v1723 = vmul.f32 %v1699, %v1715
        %v1724 = vmul.f32 %v1700, %v1714
        %1731 = vrot.lane.b32.xlu0 %v1719, 79
        %v1732 = vpop.permute.xlu0 %1731
        %1733 = vrot.lane.b32.xlu0 %v1720, 79
        %v1734 = vpop.permute.xlu0 %1733
        %1735 = vrot.lane.b32.xlu0 %v1721, 79
        %v1736 = vpop.permute.xlu0 %1735
        %1737 = vrot.lane.b32.xlu0 %v1722, 79
        %v1738 = vpop.permute.xlu0 %1737
        %1739 = vrot.lane.b32.xlu0 %v1723, 79
        %v1740 = vpop.permute.xlu0 %1739
        %1741 = vrot.lane.b32.xlu0 %v1724, 79
        %v1742 = vpop.permute.xlu0 %1741
        %v1743 = vsel %vm957, %v1732, %v1734
        %v1744 = vsel %vm957, %v1734, %v1736
        %v1745 = vsel %vm957, %v1738, %v1740
        %v1746 = vsel %vm957, %v1740, %v1742
        %1751 = vst [vmem:[#allocation3 + $0xc0] sm:$0xff] %v1743
        %1752 = vst [vmem:[#allocation3 + $0xc8] sm:$0xff] %v1744
        %1753 = vst [vmem:[#allocation3 + $0xd0] sm:$0xff] %v1745
        %1754 = vst [vmem:[#allocation3 + $0xd8] sm:$0xff] %v1746
        %v1755 = vld [vmem:[#allocation2] sm:$0xff]
        %v1756 = vld [vmem:[#allocation2 + $0x8] sm:$0xff]
        %v1757 = vld [vmem:[#allocation2 + $0x10] sm:$0xff]
        %v1758 = vld [vmem:[#allocation2 + $0x18] sm:$0xff]
        %v1759 = vld [vmem:[#allocation2 + $0x20] sm:$0xff]
        %v1760 = vld [vmem:[#allocation2 + $0x28] sm:$0xff]
        %1767 = vrot.lane.b32.xlu0 %v1755, 78
        %v1768 = vpop.permute.xlu0 %1767
        %1769 = vrot.lane.b32.xlu0 %v1756, 78
        %v1770 = vpop.permute.xlu0 %1769
        %1771 = vrot.lane.b32.xlu0 %v1757, 78
        %v1772 = vpop.permute.xlu0 %1771
        %1773 = vrot.lane.b32.xlu0 %v1758, 78
        %v1774 = vpop.permute.xlu0 %1773
        %1775 = vrot.lane.b32.xlu0 %v1759, 78
        %v1776 = vpop.permute.xlu0 %1775
        %1777 = vrot.lane.b32.xlu0 %v1760, 78
        %v1778 = vpop.permute.xlu0 %1777
        %v1779 = vsel %vm1016, %v1768, %v1770
        %v1780 = vsel %vm1016, %v1770, %v1772
        %v1781 = vsel %vm1016, %v1774, %v1776
        %v1782 = vsel %vm1016, %v1776, %v1778
        %1787 = vst [vmem:[#allocation3 + $0xe0] sm:$0xff] %v1779
        %1788 = vst [vmem:[#allocation3 + $0xe8] sm:$0xff] %v1780
        %1789 = vst [vmem:[#allocation3 + $0xf0] sm:$0xff] %v1781
        %1790 = vst [vmem:[#allocation3 + $0xf8] sm:$0xff] %v1782
        %v1791 = vld [vmem:[#allocation2] sm:$0xff]
        %v1792 = vld [vmem:[#allocation2 + $0x8] sm:$0xff]
        %v1793 = vld [vmem:[#allocation2 + $0x10] sm:$0xff]
        %v1794 = vld [vmem:[#allocation2 + $0x18] sm:$0xff]
        %v1795 = vld [vmem:[#allocation2 + $0x20] sm:$0xff]
        %v1796 = vld [vmem:[#allocation2 + $0x28] sm:$0xff]
        %v1797 = vld [vmem:[%s642] ss:$4 sm:$0x3]
        %v1799 = vlaneseq
        %v1800 = vshrl.u32 %v1799, 7
        %v1801 = vsub.s32 0, %v1800
        %v1802 = vrot.slane %v1797, %v1801
        %v1803 = vlaneseq
        %v1804 = vshrl.u32 %v1803, 7
        %v1805 = vsub.s32 1, %v1804
        %v1806 = vrot.slane %v1797, %v1805
        %1807 = vrot.lane.b32.xlu0 %v1802, 51
        %v1808 = vpop.permute.xlu0 %1807
        %1809 = vrot.lane.b32.xlu0 %v1806, 51
        %v1810 = vpop.permute.xlu0 %1809
        %v1811 = vsel %vm1059, %v1808, %v1810
        %v1815 = vmul.f32 %v1791, %v1808
        %v1816 = vmul.f32 %v1792, %v1811
        %v1817 = vmul.f32 %v1793, %v1810
        %v1818 = vmul.f32 %v1794, %v1808
        %v1819 = vmul.f32 %v1795, %v1811
        %v1820 = vmul.f32 %v1796, %v1810
        %1827 = vrot.lane.b32.xlu0 %v1815, 77
        %v1828 = vpop.permute.xlu0 %1827
        %1829 = vrot.lane.b32.xlu0 %v1816, 77
        %v1830 = vpop.permute.xlu0 %1829
        %1831 = vrot.lane.b32.xlu0 %v1817, 77
        %v1832 = vpop.permute.xlu0 %1831
        %1833 = vrot.lane.b32.xlu0 %v1818, 77
        %v1834 = vpop.permute.xlu0 %1833
        %1835 = vrot.lane.b32.xlu0 %v1819, 77
        %v1836 = vpop.permute.xlu0 %1835
        %1837 = vrot.lane.b32.xlu0 %v1820, 77
        %v1838 = vpop.permute.xlu0 %1837
        %v1839 = vsel %vm1076, %v1828, %v1830
        %v1840 = vsel %vm1076, %v1830, %v1832
        %v1841 = vsel %vm1076, %v1834, %v1836
        %v1842 = vsel %vm1076, %v1836, %v1838
        %1847 = vst [vmem:[#allocation3 + $0x100] sm:$0xff] %v1839
        %1848 = vst [vmem:[#allocation3 + $0x108] sm:$0xff] %v1840
        %1849 = vst [vmem:[#allocation3 + $0x110] sm:$0xff] %v1841
        %1850 = vst [vmem:[#allocation3 + $0x118] sm:$0xff] %v1842
        %v1851 = vld [vmem:[#allocation11] sm:$0xff]
        %v1852 = vld [vmem:[#allocation11 + $0x8] sm:$0xff]
        %v1853 = vld [vmem:[#allocation11 + $0x10] sm:$0xff]
        %v1854 = vld [vmem:[#allocation11 + $0x18] sm:$0xff]
        %v1855 = vld [vmem:[#allocation3] sm:$0xff]
        %v1856 = vld [vmem:[#allocation3 + $0x8] sm:$0xff]
        %v1857 = vld [vmem:[#allocation3 + $0x10] sm:$0xff]
        %v1858 = vld [vmem:[#allocation3 + $0x18] sm:$0xff]
        %v1859 = vld [vmem:[#allocation3 + $0x20] sm:$0xff]
        %v1860 = vld [vmem:[#allocation3 + $0x28] sm:$0xff]
        %v1861 = vld [vmem:[#allocation3 + $0x30] sm:$0xff]
        %v1862 = vld [vmem:[#allocation3 + $0x38] sm:$0xff]
        %v1863 = vld [vmem:[#allocation3 + $0x40] sm:$0xff]
        %v1864 = vld [vmem:[#allocation3 + $0x48] sm:$0xff]
        %v1865 = vld [vmem:[#allocation3 + $0x50] sm:$0xff]
        %v1866 = vld [vmem:[#allocation3 + $0x58] sm:$0xff]
        %v1867 = vld [vmem:[#allocation3 + $0x60] sm:$0xff]
        %v1868 = vld [vmem:[#allocation3 + $0x68] sm:$0xff]
        %v1869 = vld [vmem:[#allocation3 + $0x70] sm:$0xff]
        %v1870 = vld [vmem:[#allocation3 + $0x78] sm:$0xff]
        %v1871 = vld [vmem:[#allocation3 + $0x80] sm:$0xff]
        %v1872 = vld [vmem:[#allocation3 + $0x88] sm:$0xff]
        %v1873 = vld [vmem:[#allocation3 + $0x90] sm:$0xff]
        %v1874 = vld [vmem:[#allocation3 + $0x98] sm:$0xff]
        %v1875 = vld [vmem:[#allocation3 + $0xa0] sm:$0xff]
        %v1876 = vld [vmem:[#allocation3 + $0xa8] sm:$0xff]
        %v1877 = vld [vmem:[#allocation3 + $0xb0] sm:$0xff]
        %v1878 = vld [vmem:[#allocation3 + $0xb8] sm:$0xff]
        %v1879 = vld [vmem:[#allocation3 + $0xc0] sm:$0xff]
        %v1880 = vld [vmem:[#allocation3 + $0xc8] sm:$0xff]
        %v1881 = vld [vmem:[#allocation3 + $0xd0] sm:$0xff]
        %v1882 = vld [vmem:[#allocation3 + $0xd8] sm:$0xff]
        %v1883 = vld [vmem:[#allocation3 + $0xe0] sm:$0xff]
        %v1884 = vld [vmem:[#allocation3 + $0xe8] sm:$0xff]
        %v1885 = vld [vmem:[#allocation3 + $0xf0] sm:$0xff]
        %v1886 = vld [vmem:[#allocation3 + $0xf8] sm:$0xff]
        %v1887 = vld [vmem:[#allocation3 + $0x100] sm:$0xff]
        %v1888 = vld [vmem:[#allocation3 + $0x108] sm:$0xff]
        %v1889 = vld [vmem:[#allocation3 + $0x110] sm:$0xff]
        %v1890 = vld [vmem:[#allocation3 + $0x118] sm:$0xff]
        %v1891 = vld [vmem:[#allocation3 + $0x120] sm:$0x1]
        %v1892 = vld [vmem:[#allocation3 + $0x128] sm:$0x1]
        %v1894 = vsel %vm558, %v1852, 0
        %v1897 = vsel %vm558, %v1854, 0
        %v1900 = vsel %vm1249, %v1891, 0
        %v1903 = vsel %vm1249, %v1892, 0
        %1905 = vmatprep.subr.mxu0 %v1886
        %1906 = vmatpush1.msra.mxu0 %v1885
        %1907 = vmatprep.subr.mxu0 %v1884
        %1908 = vmatpush1.msra.mxu0 %v1883
        %1909 = vmatprep.subr.mxu0 %v1882
        %1910 = vmatpush1.msra.mxu0 %v1881
        %1911 = vmatprep.subr.mxu0 %v1880
        %1912 = vmatpush1.msra.mxu0 %v1879
        %1913 = vmatprep.subr.mxu0 %v1878
        %1914 = vmatpush1.msra.mxu0 %v1877
        %1915 = vmatprep.subr.mxu0 %v1876
        %1916 = vmatpush1.msra.mxu0 %v1875
        %1917 = vmatprep.subr.mxu0 %v1874
        %1918 = vmatpush1.msra.mxu0 %v1873
        %1919 = vmatprep.subr.mxu0 %v1872
        %1920 = vmatpush1.msra.mxu0 %v1871
        %1921 = vmatprep.subr.mxu0 %v1870
        %1922 = vmatpush1.msra.mxu0 %v1869
        %1923 = vmatprep.subr.mxu0 %v1868
        %1924 = vmatpush1.msra.mxu0 %v1867
        %1925 = vmatprep.subr.mxu0 %v1866
        %1926 = vmatpush1.msra.mxu0 %v1865
        %1927 = vmatprep.subr.mxu0 %v1864
        %1928 = vmatpush1.msra.mxu0 %v1863
        %1929 = vmatprep.subr.mxu0 %v1862
        %1930 = vmatpush1.msra.mxu0 %v1861
        %1931 = vmatprep.subr.mxu0 %v1860
        %1932 = vmatpush1.msra.mxu0 %v1859
        %1933 = vmatprep.subr.mxu0 %v1858
        %1934 = vmatpush1.msra.mxu0 %v1857
        %1935 = vmatprep.subr.mxu0 %v1856
        %1936 = vmatpush1.msra.mxu0 %v1855
        %1937 = vmatprep.subr.mxu0 0.0
        %1938 = vmatpush2.msra.mxu0 0.0
        %1939 = vmatprep.subr.mxu0 0.0
        %1940 = vmatpush2.msra.mxu0 0.0
        %1941 = vmatprep.subr.mxu0 0.0
        %1942 = vmatpush2.msra.mxu0 0.0
        %1943 = vmatprep.subr.mxu0 0.0
        %1944 = vmatpush2.msra.mxu0 0.0
        %1945 = vmatprep.subr.mxu0 0.0
        %1946 = vmatpush2.msra.mxu0 0.0
        %1947 = vmatprep.subr.mxu0 0.0
        %1948 = vmatpush2.msra.mxu0 0.0
        %1949 = vmatprep.subr.mxu0 0.0
        %1950 = vmatpush2.msra.mxu0 0.0
        %1951 = vmatprep.subr.mxu0 0.0
        %1952 = vmatpush2.msra.mxu0 0.0
        %1953 = vmatprep.subr.mxu0 0.0
        %1954 = vmatpush2.msra.mxu0 0.0
        %1955 = vmatprep.subr.mxu0 0.0
        %1956 = vmatpush2.msra.mxu0 0.0
        %1957 = vmatprep.subr.mxu0 0.0
        %1958 = vmatpush2.msra.mxu0 0.0
        %1959 = vmatprep.subr.mxu0 0.0
        %1960 = vmatpush2.msra.mxu0 0.0
        %1961 = vmatprep.subr.mxu0 0.0
        %1962 = vmatpush2.msra.mxu0 0.0
        %1963 = vmatprep.subr.mxu0 %v1903
        %1964 = vmatpush2.msra.mxu0 %v1900
        %1965 = vmatprep.subr.mxu0 %v1890
        %1966 = vmatpush2.msra.mxu0 %v1889
        %1967 = vmatprep.subr.mxu0 %v1888
        %1968 = vmatpush2.msra.mxu0 %v1887
        %1969 = vmatprep.mubr.f32.mxu0 %v1894
        %1970 = vmatmul.mubr.f32.gmra.mxu0 %v1851
        %v1971 = vpop.f32.mrf.mxu0
        %v1972 = vadd.f32 0.0, %v1971
        %v1973 = vpop.f32.mrf.mxu0
        %v1974 = vadd.f32 0.0, %v1973
        %1975 = vmatprep.mubr.f32.mxu0 %v1897
        %1976 = vmatmul.mubr.f32.gmra.mxu0 %v1853
        %v1977 = vpop.f32.mrf.mxu0
        %v1978 = vadd.f32 0.0, %v1977
        %v1979 = vpop.f32.mrf.mxu0
        %v1980 = vadd.f32 0.0, %v1979
        %1981 = vdwg.mxu0
        %vm1982 = vcmp.gt.f32.partialorder %v1972, 0.0
        %vm1983 = vcmp.gt.f32.partialorder %v1974, 0.0
        %vm1984 = vcmp.gt.f32.partialorder %v1978, 0.0
        %vm1985 = vcmp.gt.f32.partialorder %v1980, 0.0
        %v1986 = vld [vmem:[#allocation4] sm:$0x1]
        %v1988 = vlaneseq
        %v1989 = vshrl.u32 %v1988, 7
        %v1990 = vsub.s32 0, %v1989
        %v1991 = vrot.slane %v1986, %v1990
        %1992 = vset.pattern.permute.xlu0 0
        %1993 = vperm.xlu0 %1992, %v1991
        %v1994 = vpop.permute.xlu0 %1993
        %v1996 = vmul.f32 %v1994, %v1972
        %v1997 = vmul.f32 %v1994, %v1974
        %v1998 = vmul.f32 %v1994, %v1978
        %v1999 = vmul.f32 %v1994, %v1980
        %v2000 = vsel %vm1982, %v1972, %v1996
        %v2001 = vsel %vm1983, %v1974, %v1997
        %v2002 = vsel %vm1984, %v1978, %v1998
        %v2003 = vsel %vm1985, %v1980, %v1999
        %2004 = vst [vmem:[%s421] sm:$0xff] %v2000
        %2005 = vst [vmem:[%s421 + $0x8] sm:$0xff] %v2001
        %2006 = vst [vmem:[%s421 + $0x10] sm:$0xff] %v2002
        %2007 = vst [vmem:[%s421 + $0x18] sm:$0xff] %v2003
        %s2008 = sand.u32 %s239, 1
        %s2009 = scalar_lea.sflag [#allocation7], %s2008
        %s2010 = sand.u32 %s239, 1
        %s2011 = smul.addr %s2010, 32
        %s2012 = scalar_lea.vmem [#allocation13], %s2011
        // Predicated region
        $region73: #{tpu_custom_call.1} parent=55 // pred_check
          %p2013 = pneg %p249
        $region74: #{tpu_custom_call.1} parent=55 // pred_check_branch
          %2015 = sbr.rel (%p2013) target = $region76
        $region75: #{tpu_custom_call.1} parent=55 // pred_region
          %s2017 = ssub.s32 512, 512
          %2018 = vsyncadd %s2009, %s2017
          %s2019 = smul.addr %s32, 4
          %s2020 = smul.addr %s2019, 128
          %s2021 = scalar_lea.hbm %s9, %s2020
          %s2022 = sshll.u32 %s2012, 4
          %s2023 = int_to_ptr.vmem [resolvable:$true] %s2022
          %2028 = dma.vmem_to_hbm [thread:$0]  %s2023, 512, %s2021, %s2009, 256, 256, 16
        $region76: #{tpu_custom_call.1} parent=55 // pred_fallthru
          _
      $region56: #{tpu_custom_call.1} parent=5 // pred_fallthru
        _
      %p2029 = scmp.le.s32.totalorder 2, %s27
      // Predicated region
      $region77: #{tpu_custom_call.1} parent=5 // pred_check
        %p2030 = pneg %p2029
      $region78: #{tpu_custom_call.1} parent=5 // pred_check_branch
        %2032 = sbr.rel (%p2030) target = $region80
      $region79: #{tpu_custom_call.1} parent=5 // pred_region
        %s2033 = ssub.s32 %s27, 2
        // Predicated region
        $region81: #{tpu_custom_call.1} parent=79 // pred_check
          %p2034 = pneg %p255
        $region82: #{tpu_custom_call.1} parent=79 // pred_check_branch
          %2036 = sbr.rel (%p2034) target = $region84
        $region83: #{tpu_custom_call.1} parent=79 // pred_region
          %s2037 = sand.u32 %s240, 1
          %s2038 = scalar_lea.sflag [#allocation7], %s2037
          %s2039 = sand.u32 %s240, 1
          %s2040 = smul.addr %s2039, 32
          %s2041 = scalar_lea.vmem [#allocation13], %s2040
          %2042 = dma.done %s2038, 512
        $region84: #{tpu_custom_call.1} parent=79 // pred_fallthru
          _
      $region80: #{tpu_custom_call.1} parent=5 // pred_fallthru
        _
    $region6: #{tpu_custom_call.1} parent=1 // loop_footer
      %s31 = sadd.s32 1, %s27
    $region7: #{tpu_custom_call.1} parent=1 // loop_footer_branch
      %26 = sbr.rel target = $region3
    $region8: #{tpu_custom_call.1} parent=1 // loop_exit
      _
    %2043 = vsyncpa [#allocation6], 1
    %s2044 = scalar_lea.sflag [#allocation6], 1
    %2045 = vsyncpa %s2044, 1
    %2046 = vsyncpa [#allocation9], 1
    %s2047 = scalar_lea.sflag [#allocation9], 1
    %2048 = vsyncpa %s2047, 1
    %2049 = vsyncpa [#allocation12], 1
    %2050 = vsyncpa [#allocation7], 1
    %s2051 = scalar_lea.sflag [#allocation7], 1
    %2052 = vsyncpa %s2051, 1

</llo_original>
